<compile_context>
chip_gen: v7x
topology: tpu7x:2x2x1
jax: 0.10.0
libtpu: 0.0.40
codegen_flags: <defaults>
</compile_context>

<pallas_src>
import functools

import jax
import jax.numpy as jnp
import numpy as np
from jax import lax
from jax.experimental import pallas as pl
from jax.experimental.pallas import tpu as pltpu


def _flow_head_kernel(x_ref, w1_ref, b1_ref, w2_ref, b2_ref, o_ref, h_pad_ref,
                      *, H, W):
    # x_ref    : (1, c_in, P)        padded, flattened input slab (compute dtype)
    # w1_ref   : (c_hidden, 9*c_in)  conv1 im2col weights (compute dtype)
    # b1_ref   : (c_hidden, 1)       f32
    # w2_ref   : (c_out, 9*c_hidden) conv2 im2col weights, output-major (compute dtype)
    # b2_ref   : (c_out, 1)          f32
    # o_ref    : (1, c_out, L)       lane-dense, channel-major output
    # h_pad_ref: (c_hidden, P)       padded hidden slab scratch (compute dtype)
    Wp = W + 2                     # padded row width (lanes per padded row)
    L = H * Wp                     # working lane count (incl. 2 junk cols / row)
    P = (H + 3) * Wp               # padded slab length (1 top + 2 bottom pad rows)
    c_hidden = h_pad_ref.shape[0]
    hdt = h_pad_ref.dtype

    # ---- conv1: one fat im2col matmul, K = 9*c_in ---------------------------
    # Tap (ky, kx) is the padded input slab shifted by ky*Wp + kx lanes:
    # 9 contiguous lane slices of the ref, stacked along the sublane axis.
    im2col1 = jnp.concatenate(
        [x_ref[0, :, ky * Wp + kx: ky * Wp + kx + L]
         for ky in range(3) for kx in range(3)], axis=0)          # (9*c_in, L)
    h = jnp.dot(w1_ref[...], im2col1,
                preferred_element_type=jnp.float32)               # (c_hidden, L)
    h = jnp.maximum(h + b1_ref[...], 0.0)                         # bias + ReLU (f32)

    # Zero the junk columns (padded-row columns >= W) so they become the halo
    # when stored into the padded hidden slab.
    col = lax.broadcasted_iota(jnp.int32, (1, L), 1) % Wp
    h = jnp.where(col < W, h, 0.0)

    # ---- stage padded hidden slab for conv2's padding=1 ---------------------
    # Head/tail halo zeroed every step (megacore-safe); the in-row halo comes
    # from the masked junk columns of the interior store.
    h_pad_ref[:, 0:Wp + 1] = jnp.zeros((c_hidden, Wp + 1), hdt)
    h_pad_ref[:, Wp + 1 + L:P] = jnp.zeros((c_hidden, P - Wp - 1 - L), hdt)
    h_pad_ref[:, Wp + 1:Wp + 1 + L] = h.astype(hdt)

    # ---- conv2: fat im2col matmul, output-channel-major ---------------------
    im2col2 = jnp.concatenate(
        [h_pad_ref[:, ky * Wp + kx: ky * Wp + kx + L]
         for ky in range(3) for kx in range(3)], axis=0)          # (9*c_hidden, L)
    out = jnp.dot(w2_ref[...], im2col2,
                  preferred_element_type=jnp.float32)             # (c_out, L)
    out = out + b2_ref[...]
    o_ref[0] = out.astype(o_ref.dtype)


def flow_head_pallas(x_nchw, w1, b1, w2, b2, *, compute_dtype=jnp.bfloat16):
    """FlowHead forward. x_nchw: (N, Cin, H, W); weights in PyTorch OIHW layout."""
    N, c_in, H, W = x_nchw.shape
    c_hidden = w1.shape[0]
    c_out = w2.shape[0]
    Wp = W + 2
    L = H * Wp
    P = (H + 3) * Wp

    # Cast to the MXU compute dtype and zero-pad once in the wrapper: 1 top /
    # 2 bottom pad rows (the extra bottom row keeps every shifted im2col slice
    # in bounds), 1 left / 1 right pad column.  Flatten the padded spatial
    # dims onto the lane axis -> channel-major (N, Cin, P).  No NHWC transpose.
    x_pad = jnp.pad(x_nchw.astype(compute_dtype),
                    ((0, 0), (0, 0), (1, 2), (1, 1)))
    x_flat = x_pad.reshape(N, c_in, P)

    # Repack weights for the im2col matmuls (K ordered (ky, kx, cin)) and cast
    # to the compute dtype; biases stay f32 (applied on the f32 accumulators).
    w1_mat = jnp.transpose(w1, (0, 2, 3, 1)).reshape(c_hidden, 9 * c_in)
    w2_mat = jnp.transpose(w2, (0, 2, 3, 1)).reshape(c_out, 9 * c_hidden)
    w1_mat = w1_mat.astype(compute_dtype)
    w2_mat = w2_mat.astype(compute_dtype)
    b1_col = b1.reshape(c_hidden, 1).astype(jnp.float32)
    b2_col = b2.reshape(c_out, 1).astype(jnp.float32)

    kernel = functools.partial(_flow_head_kernel, H=H, W=W)

    # Rough per-step VMEM footprint; request a scoped limit far below v7x's
    # 64 MiB physical VMEM (review item) while keeping generous headroom.
    bpe = jnp.dtype(compute_dtype).itemsize
    obe = jnp.dtype(x_nchw.dtype).itemsize
    est = (2 * c_in * P * bpe                                   # input block (double-buffered)
           + 2 * (9 * c_in * c_hidden + 9 * c_hidden * c_out) * bpe
           + 2 * (c_hidden + c_out) * 4                         # biases
           + 2 * c_out * L * obe                                # output block
           + c_hidden * P * bpe                                 # h_pad scratch
           + 9 * (c_in + c_hidden) * L * bpe                    # im2col intermediates
           + (c_hidden + c_out) * L * 4)                        # f32 accumulators
    vmem_limit = int(min(48 * 2**20, max(16 * 2**20, 4 * est)))

    out_flat = pl.pallas_call(
        kernel,
        out_shape=jax.ShapeDtypeStruct((N, c_out, L), x_nchw.dtype),
        grid_spec=pltpu.PrefetchScalarGridSpec(
            num_scalar_prefetch=0,
            grid=(N,),
            in_specs=[
                pl.BlockSpec((1, c_in, P), lambda n: (n, 0, 0)),
                # Weight/bias blocks are grid-invariant and tiny here; at RAFT
                # scale on v7x, mark them pipeline_mode=pl.Buffered(1).
                pl.BlockSpec((c_hidden, 9 * c_in), lambda n: (0, 0)),
                pl.BlockSpec((c_hidden, 1), lambda n: (0, 0)),
                pl.BlockSpec((c_out, 9 * c_hidden), lambda n: (0, 0)),
                pl.BlockSpec((c_out, 1), lambda n: (0, 0)),
            ],
            out_specs=pl.BlockSpec((1, c_out, L), lambda n: (n, 0, 0)),
            scratch_shapes=[pltpu.VMEM((c_hidden, P), compute_dtype)],
        ),
        compiler_params=pltpu.CompilerParams(
            dimension_semantics=("parallel",),
            vmem_limit_bytes=vmem_limit,
        ),
    )(x_flat, w1_mat, b1_col, w2_mat, b2_col)

    # (N, c_out, H*(W+2)) -> (N, c_out, H, W+2) -> drop the 2 junk columns.
    return out_flat.reshape(N, c_out, H, Wp)[:, :, :, :W]


def _reference_flow_head(x_nchw, w1, b1, w2, b2):
    """Pure-JAX reference using lax.conv (NCHW, same as PyTorch)."""
    dn = lax.conv_dimension_numbers(x_nchw.shape, w1.shape,
                                    ("NCHW", "OIHW", "NCHW"))
    h = lax.conv_general_dilated(x_nchw, w1, (1, 1), ((1, 1), (1, 1)),
                                 dimension_numbers=dn)
    h = h + b1.reshape(1, -1, 1, 1)
    h = jnp.maximum(h, 0.0)
    dn2 = lax.conv_dimension_numbers(h.shape, w2.shape,
                                     ("NCHW", "OIHW", "NCHW"))
    o = lax.conv_general_dilated(h, w2, (1, 1), ((1, 1), (1, 1)),
                                 dimension_numbers=dn2)
    return o + b2.reshape(1, -1, 1, 1)


if __name__ == "__main__":
    # Small, deterministic configuration consistent with FlowHead's forward.
    N, input_dim, hidden_dim, H, W = 2, 16, 32, 16, 16

    key = jax.random.PRNGKey(0)
    kx, kw1, kb1, kw2, kb2 = jax.random.split(key, 5)

    x = jax.random.normal(kx, (N, input_dim, H, W), dtype=jnp.float32)
    # Deterministic synthetic parameters (PyTorch Conv2d weight layout OIHW).
    w1 = 0.1 * jax.random.normal(kw1, (hidden_dim, input_dim, 3, 3), jnp.float32)
    b1 = 0.1 * jax.random.normal(kb1, (hidden_dim,), jnp.float32)
    w2 = 0.1 * jax.random.normal(kw2, (2, hidden_dim, 3, 3), jnp.float32)
    b2 = 0.1 * jax.random.normal(kb2, (2,), jnp.float32)

    ref = jax.block_until_ready(_reference_flow_head(x, w1, b1, w2, b2))

    # f32 compute path: tight check that forward semantics are preserved.
    out_f32 = jax.block_until_ready(
        flow_head_pallas(x, w1, b1, w2, b2, compute_dtype=jnp.float32))
    np.testing.assert_allclose(np.asarray(out_f32), np.asarray(ref),
                               rtol=1e-3, atol=1e-3)

    # bf16 compute path (default / performance path): loose sanity check.
    out_bf16 = jax.block_until_ready(flow_head_pallas(x, w1, b1, w2, b2))
    np.testing.assert_allclose(np.asarray(out_bf16), np.asarray(ref),
                               rtol=1e-1, atol=1e-1)

    print("KERNEL_OK")
</pallas_src>

<mosaic_0001>
module attributes {stable_mosaic.version = 11 : i64} {
  func.func @_flow_head_kernel(%arg0: i32, %arg1: memref<1x16x342xf32, #tpu.memory_space<vmem>>, %arg2: memref<32x144xf32, #tpu.memory_space<vmem>>, %arg3: memref<32x1xf32, #tpu.memory_space<vmem>>, %arg4: memref<2x288xf32, #tpu.memory_space<vmem>>, %arg5: memref<2x1xf32, #tpu.memory_space<vmem>>, %arg6: memref<1x2x288xf32, #tpu.memory_space<vmem>>, %arg7: memref<32x342xf32, #tpu.memory_space<vmem>>) attributes {dimension_semantics = [#tpu.dimension_semantics<parallel>], iteration_bounds = array<i64: 2>, scalar_prefetch = 0 : i64, scratch_operands = 1 : i64, tpu.core_type = #tpu.core_type<tc>, window_params = [{transform_indices = @transform_0, window_bounds = array<i64: 1, 16, 342>}, {pipeline_mode = #tpu.pipeline_mode<synchronous>, transform_indices = @transform_1, window_bounds = array<i64: 32, 144>}, {pipeline_mode = #tpu.pipeline_mode<synchronous>, transform_indices = @transform_2, window_bounds = array<i64: 32, 1>}, {pipeline_mode = #tpu.pipeline_mode<synchronous>, transform_indices = @transform_3, window_bounds = array<i64: 2, 288>}, {pipeline_mode = #tpu.pipeline_mode<synchronous>, transform_indices = @transform_4, window_bounds = array<i64: 2, 1>}, {transform_indices = @transform_5, window_bounds = array<i64: 1, 2, 288>}]} {
    %c0 = arith.constant 0 : index
    %c0_0 = arith.constant 0 : index
    %c0_1 = arith.constant 0 : index
    %0 = vector.load %arg1[%c0, %c0_0, %c0_1] : memref<1x16x342xf32, #tpu.memory_space<vmem>>, vector<1x16x288xf32>
    %1 = vector.shape_cast %0 : vector<1x16x288xf32> to vector<16x288xf32>
    %c0_2 = arith.constant 0 : index
    %c0_3 = arith.constant 0 : index
    %c1 = arith.constant 1 : index
    %2 = vector.load %arg1[%c0_2, %c0_3, %c1] : memref<1x16x342xf32, #tpu.memory_space<vmem>>, vector<1x16x288xf32>
    %3 = vector.shape_cast %2 : vector<1x16x288xf32> to vector<16x288xf32>
    %c0_4 = arith.constant 0 : index
    %c0_5 = arith.constant 0 : index
    %c2 = arith.constant 2 : index
    %4 = vector.load %arg1[%c0_4, %c0_5, %c2] : memref<1x16x342xf32, #tpu.memory_space<vmem>>, vector<1x16x288xf32>
    %5 = vector.shape_cast %4 : vector<1x16x288xf32> to vector<16x288xf32>
    %c0_6 = arith.constant 0 : index
    %c0_7 = arith.constant 0 : index
    %c18 = arith.constant 18 : index
    %6 = vector.load %arg1[%c0_6, %c0_7, %c18] : memref<1x16x342xf32, #tpu.memory_space<vmem>>, vector<1x16x288xf32>
    %7 = vector.shape_cast %6 : vector<1x16x288xf32> to vector<16x288xf32>
    %c0_8 = arith.constant 0 : index
    %c0_9 = arith.constant 0 : index
    %c19 = arith.constant 19 : index
    %8 = vector.load %arg1[%c0_8, %c0_9, %c19] : memref<1x16x342xf32, #tpu.memory_space<vmem>>, vector<1x16x288xf32>
    %9 = vector.shape_cast %8 : vector<1x16x288xf32> to vector<16x288xf32>
    %c0_10 = arith.constant 0 : index
    %c0_11 = arith.constant 0 : index
    %c20 = arith.constant 20 : index
    %10 = vector.load %arg1[%c0_10, %c0_11, %c20] : memref<1x16x342xf32, #tpu.memory_space<vmem>>, vector<1x16x288xf32>
    %11 = vector.shape_cast %10 : vector<1x16x288xf32> to vector<16x288xf32>
    %c0_12 = arith.constant 0 : index
    %c0_13 = arith.constant 0 : index
    %c36 = arith.constant 36 : index
    %12 = vector.load %arg1[%c0_12, %c0_13, %c36] : memref<1x16x342xf32, #tpu.memory_space<vmem>>, vector<1x16x288xf32>
    %13 = vector.shape_cast %12 : vector<1x16x288xf32> to vector<16x288xf32>
    %c0_14 = arith.constant 0 : index
    %c0_15 = arith.constant 0 : index
    %c37 = arith.constant 37 : index
    %14 = vector.load %arg1[%c0_14, %c0_15, %c37] : memref<1x16x342xf32, #tpu.memory_space<vmem>>, vector<1x16x288xf32>
    %15 = vector.shape_cast %14 : vector<1x16x288xf32> to vector<16x288xf32>
    %c0_16 = arith.constant 0 : index
    %c0_17 = arith.constant 0 : index
    %c38 = arith.constant 38 : index
    %16 = vector.load %arg1[%c0_16, %c0_17, %c38] : memref<1x16x342xf32, #tpu.memory_space<vmem>>, vector<1x16x288xf32>
    %17 = vector.shape_cast %16 : vector<1x16x288xf32> to vector<16x288xf32>
    %18 = tpu.concatenate %1, %3, %5, %7, %9, %11, %13, %15, %17 in 0 : vector<16x288xf32>, vector<16x288xf32>, vector<16x288xf32>, vector<16x288xf32>, vector<16x288xf32>, vector<16x288xf32>, vector<16x288xf32>, vector<16x288xf32>, vector<16x288xf32> -> vector<144x288xf32>
    %c0_18 = arith.constant 0 : index
    %c0_19 = arith.constant 0 : index
    %19 = vector.load %arg2[%c0_18, %c0_19] : memref<32x144xf32, #tpu.memory_space<vmem>>, vector<32x144xf32>
    %cst = arith.constant dense<0.000000e+00> : vector<32x288xf32>
    %20 = tpu.matmul %19, %18, %cst {dimension_numbers = #tpu.dot_dimension_numbers<[1], [0], [0], [1], [0, 0, 1, 1], [], []>} : vector<32x144xf32>, vector<144x288xf32>, vector<32x288xf32> -> vector<32x288xf32>
    %c0_20 = arith.constant 0 : index
    %c0_21 = arith.constant 0 : index
    %21 = vector.load %arg3[%c0_20, %c0_21] : memref<32x1xf32, #tpu.memory_space<vmem>>, vector<32x1xf32>
    %22 = vector.broadcast %21 : vector<32x1xf32> to vector<32x288xf32>
    %23 = arith.addf %20, %22 : vector<32x288xf32>
    %cst_22 = arith.constant 0.000000e+00 : f32
    %24 = vector.broadcast %cst_22 : f32 to vector<32x288xf32>
    %25 = arith.maximumf %23, %24 : vector<32x288xf32>
    %26 = tpu.iota {dimensions = array<i32: 1>} : vector<1x288xi32>
    %c18_i32 = arith.constant 18 : i32
    %c0_i32 = arith.constant 0 : i32
    %27 = arith.cmpi eq, %c18_i32, %c0_i32 : i32
    %c1_i32 = arith.constant 1 : i32
    %28 = arith.select %27, %c1_i32, %c18_i32 : i32
    %29 = vector.broadcast %28 : i32 to vector<1x288xi32>
    %30 = arith.remsi %26, %29 : vector<1x288xi32>
    %c0_i32_23 = arith.constant 0 : i32
    %31 = vector.broadcast %c0_i32_23 : i32 to vector<1x288xi32>
    %32 = arith.cmpi ne, %30, %31 : vector<1x288xi32>
    %c0_i32_24 = arith.constant 0 : i32
    %33 = vector.broadcast %c0_i32_24 : i32 to vector<1x288xi32>
    %34 = arith.cmpi slt, %30, %33 : vector<1x288xi32>
    %c0_i32_25 = arith.constant 0 : i32
    %35 = arith.cmpi slt, %28, %c0_i32_25 : i32
    %36 = vector.broadcast %35 : i1 to vector<1x288xi1>
    %37 = vector.broadcast %36 : vector<1x288xi1> to vector<1x288xi1>
    %38 = arith.xori %34, %37 : vector<1x288xi1>
    %39 = arith.andi %38, %32 : vector<1x288xi1>
    %40 = vector.broadcast %28 : i32 to vector<1x288xi32>
    %41 = arith.addi %30, %40 : vector<1x288xi32>
    %42 = arith.select %39, %41, %30 : vector<1x288xi1>, vector<1x288xi32>
    %c16_i32 = arith.constant 16 : i32
    %43 = vector.broadcast %c16_i32 : i32 to vector<1x288xi32>
    %44 = arith.cmpi slt, %42, %43 : vector<1x288xi32>
    %cst_26 = arith.constant 0.000000e+00 : f32
    %45 = vector.shape_cast %44 : vector<1x288xi1> to vector<1x288xi1>
    %46 = vector.broadcast %45 : vector<1x288xi1> to vector<32x288xi1>
    %47 = vector.broadcast %cst_26 : f32 to vector<32x288xf32>
    %48 = arith.select %46, %25, %47 : vector<32x288xi1>, vector<32x288xf32>
    %cst_27 = arith.constant 0.000000e+00 : f32
    %49 = vector.broadcast %cst_27 : f32 to vector<32x19xf32>
    %c0_28 = arith.constant 0 : index
    %c0_29 = arith.constant 0 : index
    %50 = vector.load %arg7[%c0_28, %c0_29] : memref<32x342xf32, #tpu.memory_space<vmem>>, vector<32x19xf32>
    tpu.vector_store %arg7[%c0_28, %c0_29], %49 {strides = array<i32>} : memref<32x342xf32, #tpu.memory_space<vmem>>, vector<32x19xf32>,
    %cst_30 = arith.constant 0.000000e+00 : f32
    %51 = vector.broadcast %cst_30 : f32 to vector<32x35xf32>
    %c0_31 = arith.constant 0 : index
    %c307 = arith.constant 307 : index
    %52 = vector.load %arg7[%c0_31, %c307] : memref<32x342xf32, #tpu.memory_space<vmem>>, vector<32x35xf32>
    tpu.vector_store %arg7[%c0_31, %c307], %51 {strides = array<i32>} : memref<32x342xf32, #tpu.memory_space<vmem>>, vector<32x35xf32>,
    %c0_32 = arith.constant 0 : index
    %c19_33 = arith.constant 19 : index
    %53 = vector.load %arg7[%c0_32, %c19_33] : memref<32x342xf32, #tpu.memory_space<vmem>>, vector<32x288xf32>
    tpu.vector_store %arg7[%c0_32, %c19_33], %48 {strides = array<i32>} : memref<32x342xf32, #tpu.memory_space<vmem>>, vector<32x288xf32>,
    %c0_34 = arith.constant 0 : index
    %c0_35 = arith.constant 0 : index
    %54 = vector.load %arg7[%c0_34, %c0_35] : memref<32x342xf32, #tpu.memory_space<vmem>>, vector<32x288xf32>
    %c0_36 = arith.constant 0 : index
    %c1_37 = arith.constant 1 : index
    %55 = vector.load %arg7[%c0_36, %c1_37] : memref<32x342xf32, #tpu.memory_space<vmem>>, vector<32x288xf32>
    %c0_38 = arith.constant 0 : index
    %c2_39 = arith.constant 2 : index
    %56 = vector.load %arg7[%c0_38, %c2_39] : memref<32x342xf32, #tpu.memory_space<vmem>>, vector<32x288xf32>
    %c0_40 = arith.constant 0 : index
    %c18_41 = arith.constant 18 : index
    %57 = vector.load %arg7[%c0_40, %c18_41] : memref<32x342xf32, #tpu.memory_space<vmem>>, vector<32x288xf32>
    %c0_42 = arith.constant 0 : index
    %c19_43 = arith.constant 19 : index
    %58 = vector.load %arg7[%c0_42, %c19_43] : memref<32x342xf32, #tpu.memory_space<vmem>>, vector<32x288xf32>
    %c0_44 = arith.constant 0 : index
    %c20_45 = arith.constant 20 : index
    %59 = vector.load %arg7[%c0_44, %c20_45] : memref<32x342xf32, #tpu.memory_space<vmem>>, vector<32x288xf32>
    %c0_46 = arith.constant 0 : index
    %c36_47 = arith.constant 36 : index
    %60 = vector.load %arg7[%c0_46, %c36_47] : memref<32x342xf32, #tpu.memory_space<vmem>>, vector<32x288xf32>
    %c0_48 = arith.constant 0 : index
    %c37_49 = arith.constant 37 : index
    %61 = vector.load %arg7[%c0_48, %c37_49] : memref<32x342xf32, #tpu.memory_space<vmem>>, vector<32x288xf32>
    %c0_50 = arith.constant 0 : index
    %c38_51 = arith.constant 38 : index
    %62 = vector.load %arg7[%c0_50, %c38_51] : memref<32x342xf32, #tpu.memory_space<vmem>>, vector<32x288xf32>
    %63 = tpu.concatenate %54, %55, %56, %57, %58, %59, %60, %61, %62 in 0 : vector<32x288xf32>, vector<32x288xf32>, vector<32x288xf32>, vector<32x288xf32>, vector<32x288xf32>, vector<32x288xf32>, vector<32x288xf32>, vector<32x288xf32>, vector<32x288xf32> -> vector<288x288xf32>
    %c0_52 = arith.constant 0 : index
    %c0_53 = arith.constant 0 : index
    %64 = vector.load %arg4[%c0_52, %c0_53] : memref<2x288xf32, #tpu.memory_space<vmem>>, vector<2x288xf32>
    %cst_54 = arith.constant dense<0.000000e+00> : vector<2x288xf32>
    %65 = tpu.matmul %64, %63, %cst_54 {dimension_numbers = #tpu.dot_dimension_numbers<[1], [0], [0], [1], [0, 0, 1, 1], [], []>} : vector<2x288xf32>, vector<288x288xf32>, vector<2x288xf32> -> vector<2x288xf32>
    %c0_55 = arith.constant 0 : index
    %c0_56 = arith.constant 0 : index
    %66 = vector.load %arg5[%c0_55, %c0_56] : memref<2x1xf32, #tpu.memory_space<vmem>>, vector<2x1xf32>
    %67 = vector.broadcast %66 : vector<2x1xf32> to vector<2x288xf32>
    %68 = arith.addf %65, %67 : vector<2x288xf32>
    %c0_57 = arith.constant 0 : index
    %c0_58 = arith.constant 0 : index
    %c0_59 = arith.constant 0 : index
    %69 = vector.load %arg6[%c0_57, %c0_58, %c0_59] : memref<1x2x288xf32, #tpu.memory_space<vmem>>, vector<1x2x288xf32>
    %70 = vector.shape_cast %69 : vector<1x2x288xf32> to vector<2x288xf32>
    %71 = vector.shape_cast %68 : vector<2x288xf32> to vector<1x2x288xf32>
    tpu.vector_store %arg6[%c0_57, %c0_58, %c0_59], %71 {strides = array<i32>} : memref<1x2x288xf32, #tpu.memory_space<vmem>>, vector<1x2x288xf32>,
    return
  }
  func.func @transform_0(%arg0: i32) -> (i32, i32, i32) {
    %c0_i32 = arith.constant 0 : i32
    %c0_i32_0 = arith.constant 0 : i32
    %c0_i32_1 = arith.constant 0 : i32
    return %arg0, %c0_i32, %c0_i32_0 : i32, i32, i32
  }
  func.func @transform_1(%arg0: i32) -> (i32, i32) {
    %c0_i32 = arith.constant 0 : i32
    %c0_i32_0 = arith.constant 0 : i32
    %c0_i32_1 = arith.constant 0 : i32
    return %c0_i32, %c0_i32_0 : i32, i32
  }
  func.func @transform_2(%arg0: i32) -> (i32, i32) {
    %c0_i32 = arith.constant 0 : i32
    %c0_i32_0 = arith.constant 0 : i32
    %c0_i32_1 = arith.constant 0 : i32
    return %c0_i32, %c0_i32_0 : i32, i32
  }
  func.func @transform_3(%arg0: i32) -> (i32, i32) {
    %c0_i32 = arith.constant 0 : i32
    %c0_i32_0 = arith.constant 0 : i32
    %c0_i32_1 = arith.constant 0 : i32
    return %c0_i32, %c0_i32_0 : i32, i32
  }
  func.func @transform_4(%arg0: i32) -> (i32, i32) {
    %c0_i32 = arith.constant 0 : i32
    %c0_i32_0 = arith.constant 0 : i32
    %c0_i32_1 = arith.constant 0 : i32
    return %c0_i32, %c0_i32_0 : i32, i32
  }
  func.func @transform_5(%arg0: i32) -> (i32, i32, i32) {
    %c0_i32 = arith.constant 0 : i32
    %c0_i32_0 = arith.constant 0 : i32
    %c0_i32_1 = arith.constant 0 : i32
    return %arg0, %c0_i32, %c0_i32_0 : i32, i32, i32
  }
}

</mosaic_0001>

<llo_original>
// kernel: tpu_custom_call.1
$region0: #{tpu_custom_call.1}
  #allocation0 [shape = 'u32[]', space=smem, size = 0x4, offset = 0x4, fixed_abs, tag = 'smem constant byte address 0x4 - core index']
  #allocation1 [shape = 'u32[144,128]{1,0:T(1,128)}', space=vmem, size = 0x12000, scoped, tag = 'internal scratch']
  #allocation2 [shape = 'f32[32,342]{1,0:T(8,128)}', space=vmem, size = 0xc000, scoped, tag = 'scratch operand']
  %s0 = inlined_call_operand.hbm [shape: f32[2,16,342], index: 0, kind: input, shape index: {}]
  %s1 = inlined_call_operand.hbm [shape: f32[32,144], index: 1, kind: input, shape index: {}]
  %s2 = inlined_call_operand.vmem [shape: f32[32,1], index: 2, kind: input, shape index: {}]
  %s3 = inlined_call_operand.vmem [shape: f32[2,288], index: 3, kind: input, shape index: {}]
  %s4 = inlined_call_operand.vmem [shape: f32[2,1], index: 4, kind: input, shape index: {}]
  %s5 = inlined_call_operand.hbm [shape: f32[2,2,288], index: 5, kind: output, shape index: {}]
  %s6 = sld [smem:[#allocation0]]
  $region61: #{tpu_custom_call.1} parent=0
    _
  %s8 = ssub.s32 1, %s6
  %s9 = scalar_select 0, %s8, %s6
  $region1: #{tpu_custom_call.1} parent=0
    #allocation3 [shape = 'u8[49152]{0}', space=vmem, size = 0xc000, scoped, tag = 'input window, operand 0']
    #allocation4 [shape = 's32[2]{0}', space=sflag, size = 0x8, scoped, tag = 'scoped memory for tpu_custom_call.1']
    #allocation5 [shape = 's32[2]{0}', space=sflag, size = 0x8, scoped, tag = 'scoped memory for tpu_custom_call.1']
    #allocation6 [shape = 'u8[32768]{0}', space=vmem, size = 0x8000, scoped, tag = 'input window, operand 1, single buffered']
    #allocation7 [shape = 's32[1]{0}', space=sflag, size = 0x4, scoped, tag = 'scoped memory for tpu_custom_call.1']
    #allocation8 [shape = 'u8[6144]{0}', space=vmem, size = 0x1800, scoped, tag = 'output window, operand 0']
    %10 = vsyncpa [#allocation4], 0
    %s11 = scalar_lea.sflag [#allocation4], 1
    %12 = vsyncpa %s11, 0
    %13 = vsyncpa [#allocation7], 0
    %14 = vsyncpa [#allocation5], 0
    %s15 = scalar_lea.sflag [#allocation5], 1
    %16 = vsyncpa %s15, 0
    loop: start=0, step=1, limit=4
    $region2: #{tpu_custom_call.1} parent=1 // loop_pre_header
      _
    $region3: #{tpu_custom_call.1} parent=1 // loop_header
      %s18 = sphi 0, %s22
      %p19 = scmp.ge.s32.totalorder %s18, 4
      %s28 = sphi 0, %s30
      %s31 = sphi 0, %s28
      %s32 = sphi 0, %s31
      %s48 = sphi 0, %s32
      %s52 = sphi 0, %s52
      %s54 = sphi 0, %s52
      %s55 = sphi 0, %s54
      %s69 = sphi 0, %s55
      %s73 = sphi 0, %s73
      %s75 = sphi 0, %s73
      %s76 = sphi 0, %s75
      %s90 = sphi 0, %s76
      %s94 = sphi 0, %s94
      %s96 = sphi 0, %s94
      %s97 = sphi 0, %s96
      %s111 = sphi 0, %s97
      %s115 = sphi 0, %s115
      %s117 = sphi 0, %s115
      %s118 = sphi 0, %s117
      %s132 = sphi 0, %s118
      %s138 = sphi 0, %s140
      %s141 = sphi 0, %s138
      %s142 = sphi 0, %s141
      %s158 = sphi 0, %s142
    $region4: #{tpu_custom_call.1} parent=1 // loop_header_branch
      %21 = sbr.rel (%p19) target = $region8
    $region5: #{tpu_custom_call.1} parent=1 // loop_body
      %s23 = ssub.s32 %s18, 1
      %s24 = ssub.s32 %s18, 2
      %s25 = sadd.s32 %s18, 1
      %s26 = ssub.s32 %s18, %s25
      %p27 = scmp.eq.s32.totalorder %s26, 0
      %s29 = sadd.s32 %s28, 1
      %s30 = scalar_select %p27, %s28, %s29
      %p33 = pneg %p27
      %p34 = scmp.eq.s32.totalorder %s18, 1
      %p35 = por %p33, %p34
      %p36 = scmp.ne.s32.totalorder %s28, %s31
      %p37 = scmp.eq.s32.totalorder %s18, 0
      %p38 = por %p36, %p37
      %p39 = scmp.ne.s32.totalorder %s28, %s31
      %p40 = scmp.eq.s32.totalorder %s23, 1
      %p41 = por %p39, %p40
      %p42 = scmp.ne.s32.totalorder %s31, %s32
      %p43 = scmp.eq.s32.totalorder %s23, 0
      %p44 = por %p42, %p43
      %p45 = scmp.ne.s32.totalorder %s31, %s32
      %p46 = scmp.eq.s32.totalorder %s24, 1
      %p47 = por %p45, %p46
      %p49 = scmp.ne.s32.totalorder %s32, %s48
      %p50 = scmp.eq.s32.totalorder %s24, 0
      %p51 = por %p49, %p50
      %s53 = sadd.s32 %s52, 1
      %p56 = scmp.eq.s32.totalorder %s18, 1
      %p57 = scmp.ne.s32.totalorder %s52, %s54
      %p58 = scmp.eq.s32.totalorder %s18, 0
      %p59 = por %p57, %p58
      %p60 = scmp.ne.s32.totalorder %s52, %s54
      %p61 = scmp.eq.s32.totalorder %s23, 1
      %p62 = por %p60, %p61
      %p63 = scmp.ne.s32.totalorder %s54, %s55
      %p64 = scmp.eq.s32.totalorder %s23, 0
      %p65 = por %p63, %p64
      %p66 = scmp.ne.s32.totalorder %s54, %s55
      %p67 = scmp.eq.s32.totalorder %s24, 1
      %p68 = por %p66, %p67
      %p70 = scmp.ne.s32.totalorder %s55, %s69
      %p71 = scmp.eq.s32.totalorder %s24, 0
      %p72 = por %p70, %p71
      %s74 = sadd.s32 %s73, 1
      %p77 = scmp.eq.s32.totalorder %s18, 1
      %p78 = scmp.ne.s32.totalorder %s73, %s75
      %p79 = scmp.eq.s32.totalorder %s18, 0
      %p80 = por %p78, %p79
      %p81 = scmp.ne.s32.totalorder %s73, %s75
      %p82 = scmp.eq.s32.totalorder %s23, 1
      %p83 = por %p81, %p82
      %p84 = scmp.ne.s32.totalorder %s75, %s76
      %p85 = scmp.eq.s32.totalorder %s23, 0
      %p86 = por %p84, %p85
      %p87 = scmp.ne.s32.totalorder %s75, %s76
      %p88 = scmp.eq.s32.totalorder %s24, 1
      %p89 = por %p87, %p88
      %p91 = scmp.ne.s32.totalorder %s76, %s90
      %p92 = scmp.eq.s32.totalorder %s24, 0
      %p93 = por %p91, %p92
      %s95 = sadd.s32 %s94, 1
      %p98 = scmp.eq.s32.totalorder %s18, 1
      %p99 = scmp.ne.s32.totalorder %s94, %s96
      %p100 = scmp.eq.s32.totalorder %s18, 0
      %p101 = por %p99, %p100
      %p102 = scmp.ne.s32.totalorder %s94, %s96
      %p103 = scmp.eq.s32.totalorder %s23, 1
      %p104 = por %p102, %p103
      %p105 = scmp.ne.s32.totalorder %s96, %s97
      %p106 = scmp.eq.s32.totalorder %s23, 0
      %p107 = por %p105, %p106
      %p108 = scmp.ne.s32.totalorder %s96, %s97
      %p109 = scmp.eq.s32.totalorder %s24, 1
      %p110 = por %p108, %p109
      %p112 = scmp.ne.s32.totalorder %s97, %s111
      %p113 = scmp.eq.s32.totalorder %s24, 0
      %p114 = por %p112, %p113
      %s116 = sadd.s32 %s115, 1
      %p119 = scmp.eq.s32.totalorder %s18, 1
      %p120 = scmp.ne.s32.totalorder %s115, %s117
      %p121 = scmp.eq.s32.totalorder %s18, 0
      %p122 = por %p120, %p121
      %p123 = scmp.ne.s32.totalorder %s115, %s117
      %p124 = scmp.eq.s32.totalorder %s23, 1
      %p125 = por %p123, %p124
      %p126 = scmp.ne.s32.totalorder %s117, %s118
      %p127 = scmp.eq.s32.totalorder %s23, 0
      %p128 = por %p126, %p127
      %p129 = scmp.ne.s32.totalorder %s117, %s118
      %p130 = scmp.eq.s32.totalorder %s24, 1
      %p131 = por %p129, %p130
      %p133 = scmp.ne.s32.totalorder %s118, %s132
      %p134 = scmp.eq.s32.totalorder %s24, 0
      %p135 = por %p133, %p134
      %s136 = ssub.s32 %s18, %s25
      %p137 = scmp.eq.s32.totalorder %s136, 0
      %s139 = sadd.s32 %s138, 1
      %s140 = scalar_select %p137, %s138, %s139
      %p143 = pneg %p137
      %p144 = scmp.eq.s32.totalorder %s18, 1
      %p145 = por %p143, %p144
      %p146 = scmp.ne.s32.totalorder %s138, %s141
      %p147 = scmp.eq.s32.totalorder %s18, 0
      %p148 = por %p146, %p147
      %p149 = scmp.ne.s32.totalorder %s138, %s141
      %p150 = scmp.eq.s32.totalorder %s23, 1
      %p151 = por %p149, %p150
      %p152 = scmp.ne.s32.totalorder %s141, %s142
      %p153 = scmp.eq.s32.totalorder %s23, 0
      %p154 = por %p152, %p153
      %p155 = scmp.ne.s32.totalorder %s141, %s142
      %p156 = scmp.eq.s32.totalorder %s24, 1
      %p157 = por %p155, %p156
      %p159 = scmp.ne.s32.totalorder %s142, %s158
      %p160 = scmp.eq.s32.totalorder %s24, 0
      %p161 = por %p159, %p160
      %p162 = scmp.le.s32.totalorder 1, %s18
      %p163 = scmp.lt.s32.totalorder %s18, 3
      %p164 = pnand %p162, %p163
      %p165 = pneg %p164
      // Predicated region
      $region9: #{tpu_custom_call.1} parent=5 // pred_check
        _
      $region10: #{tpu_custom_call.1} parent=5 // pred_check_branch
        %167 = sbr.rel (%p164) target = $region12
      $region11: #{tpu_custom_call.1} parent=5 // pred_region
        %s168 = ssub.s32 %s18, 1
        // Predicated region
        $region13: #{tpu_custom_call.1} parent=11 // pred_check
          %p169 = pneg %p65
        $region14: #{tpu_custom_call.1} parent=11 // pred_check_branch
          %171 = sbr.rel (%p169) target = $region16
        $region15: #{tpu_custom_call.1} parent=11 // pred_region
          %s173 = ssub.s32 1024, 1024
          %174 = vsyncadd [#allocation7], %s173
          %s175 = sshll.u32 [#allocation6], 4
          %s176 = int_to_ptr.vmem [resolvable:$true] %s175
          %181 = dma.hbm_to_vmem [thread:$0]  %s1, 1024, %s176, [#allocation7], 256, 256, 16
        $region16: #{tpu_custom_call.1} parent=11 // pred_fallthru
          _
        // Predicated region
        $region17: #{tpu_custom_call.1} parent=11 // pred_check
          %p182 = pneg %p86
        $region18: #{tpu_custom_call.1} parent=11 // pred_check_branch
          %184 = sbr.rel (%p182) target = $region20
        $region19: #{tpu_custom_call.1} parent=11 // pred_region
          _
        $region20: #{tpu_custom_call.1} parent=11 // pred_fallthru
          _
        // Predicated region
        $region21: #{tpu_custom_call.1} parent=11 // pred_check
          %p185 = pneg %p107
        $region22: #{tpu_custom_call.1} parent=11 // pred_check_branch
          %187 = sbr.rel (%p185) target = $region24
        $region23: #{tpu_custom_call.1} parent=11 // pred_region
          _
        $region24: #{tpu_custom_call.1} parent=11 // pred_fallthru
          _
        // Predicated region
        $region25: #{tpu_custom_call.1} parent=11 // pred_check
          %p188 = pneg %p128
        $region26: #{tpu_custom_call.1} parent=11 // pred_check_branch
          %190 = sbr.rel (%p188) target = $region28
        $region27: #{tpu_custom_call.1} parent=11 // pred_region
          _
        $region28: #{tpu_custom_call.1} parent=11 // pred_fallthru
          _
      $region12: #{tpu_custom_call.1} parent=5 // pred_fallthru
        _
      %p191 = scmp.lt.s32.totalorder %s18, 2
      // Predicated region
      $region29: #{tpu_custom_call.1} parent=5 // pred_check
        %p192 = pneg %p191
      $region30: #{tpu_custom_call.1} parent=5 // pred_check_branch
        %194 = sbr.rel (%p192) target = $region32
      $region31: #{tpu_custom_call.1} parent=5 // pred_region
        // Predicated region
        $region33: #{tpu_custom_call.1} parent=31 // pred_check
          %p195 = pneg %p38
        $region34: #{tpu_custom_call.1} parent=31 // pred_check_branch
          %197 = sbr.rel (%p195) target = $region36
        $region35: #{tpu_custom_call.1} parent=31 // pred_region
          %s198 = sand.u32 %s28, 1
          %s199 = scalar_lea.sflag [#allocation4], %s198
          %s200 = sand.u32 %s28, 1
          %s201 = smul.addr %s200, 48
          %s202 = scalar_lea.vmem [#allocation3], %s201
          %s204 = ssub.s32 768, 768
          %205 = vsyncadd %s199, %s204
          %s206 = smul.addr %s18, 6
          %s207 = smul.addr %s206, 128
          %s208 = scalar_lea.hbm %s0, %s207
          %s209 = sshll.u32 %s202, 4
          %s210 = int_to_ptr.vmem [resolvable:$true] %s209
          %215 = dma.hbm_to_vmem [thread:$0]  %s208, 768, %s210, %s199, 384, 384, 24
        $region36: #{tpu_custom_call.1} parent=31 // pred_fallthru
          _
      $region32: #{tpu_custom_call.1} parent=5 // pred_fallthru
        _
      %p216 = scmp.le.s32.totalorder 1, %s18
      %p217 = scmp.lt.s32.totalorder %s18, 3
      %p218 = pnand %p216, %p217
      %p219 = pneg %p218
      // Predicated region
      $region37: #{tpu_custom_call.1} parent=5 // pred_check
        _
      $region38: #{tpu_custom_call.1} parent=5 // pred_check_branch
        %221 = sbr.rel (%p218) target = $region40
      $region39: #{tpu_custom_call.1} parent=5 // pred_region
        %s222 = ssub.s32 %s18, 1
        %s223 = sand.u32 %s31, 1
        %s224 = scalar_lea.sflag [#allocation4], %s223
        %s225 = sand.u32 %s31, 1
        %s226 = smul.addr %s225, 48
        %s227 = scalar_lea.vmem [#allocation3], %s226
        // Predicated region
        $region41: #{tpu_custom_call.1} parent=39 // pred_check
          %p228 = pneg %p44
        $region42: #{tpu_custom_call.1} parent=39 // pred_check_branch
          %230 = sbr.rel (%p228) target = $region44
        $region43: #{tpu_custom_call.1} parent=39 // pred_region
          %231 = dma.done %s224, 768
        $region44: #{tpu_custom_call.1} parent=39 // pred_fallthru
          _
        // Predicated region
        $region45: #{tpu_custom_call.1} parent=39 // pred_check
          %p232 = pneg %p65
        $region46: #{tpu_custom_call.1} parent=39 // pred_check_branch
          %234 = sbr.rel (%p232) target = $region48
        $region47: #{tpu_custom_call.1} parent=39 // pred_region
          %235 = dma.done [#allocation7], 1024
        $region48: #{tpu_custom_call.1} parent=39 // pred_fallthru
          _
        %s236 = sand.u32 %s31, 1
        %s237 = scalar_lea.sflag [#allocation4], %s236
        %s238 = sand.u32 %s31, 1
        %s239 = smul.addr %s238, 48
        %s240 = scalar_lea.vmem [#allocation3], %s239
        %p241 = pneg %p44
        %p242 = pneg %p41
        %p243 = pneg %p65
        %p244 = pneg %p62
        %p245 = pneg %p86
        %p246 = pneg %p83
        %p247 = pneg %p107
        %p248 = pneg %p104
        %p249 = pneg %p128
        %p250 = pneg %p125
        %p251 = pneg %p154
        %p252 = pneg %p151
        %s253 = sand.u32 %s141, 1
        %s254 = scalar_lea.sflag [#allocation5], %s253
        %s255 = sand.u32 %s141, 1
        %s256 = smul.addr %s255, 6
        %s257 = scalar_lea.vmem [#allocation8], %s256
        %v258 = vld [vmem:[%s227] sm:$0xff]
        %v259 = vld [vmem:[%s227 + $0x8] sm:$0xff]
        %v260 = vld [vmem:[%s227 + $0x10] sm:$0xff]
        %v261 = vld [vmem:[%s227 + $0x18] sm:$0xff]
        %v262 = vld [vmem:[%s227 + $0x20] sm:$0xff]
        %v263 = vld [vmem:[%s227 + $0x28] sm:$0xff]
        %270 = vrot.lane.b32.xlu0 %v258, 127
        %v271 = vpop.permute.xlu0 %270
        %272 = vrot.lane.b32.xlu0 %v259, 127
        %v273 = vpop.permute.xlu0 %272
        %274 = vrot.lane.b32.xlu0 %v260, 127
        %v275 = vpop.permute.xlu0 %274
        %276 = vrot.lane.b32.xlu0 %v261, 127
        %v277 = vpop.permute.xlu0 %276
        %278 = vrot.lane.b32.xlu0 %v262, 127
        %v279 = vpop.permute.xlu0 %278
        %280 = vrot.lane.b32.xlu0 %v263, 127
        %v281 = vpop.permute.xlu0 %280
        %vm282 = vcmask 1039360
        %v283 = vsel %vm282, %v271, %v273
        %v284 = vsel %vm282, %v273, %v275
        %v285 = vsel %vm282, %v277, %v279
        %v286 = vsel %vm282, %v279, %v281
        %293 = vrot.lane.b32.xlu0 %v258, 126
        %v294 = vpop.permute.xlu0 %293
        %295 = vrot.lane.b32.xlu0 %v259, 126
        %v296 = vpop.permute.xlu0 %295
        %297 = vrot.lane.b32.xlu0 %v260, 126
        %v298 = vpop.permute.xlu0 %297
        %299 = vrot.lane.b32.xlu0 %v261, 126
        %v300 = vpop.permute.xlu0 %299
        %301 = vrot.lane.b32.xlu0 %v262, 126
        %v302 = vpop.permute.xlu0 %301
        %303 = vrot.lane.b32.xlu0 %v263, 126
        %v304 = vpop.permute.xlu0 %303
        %vm305 = vcmask 1031168
        %v306 = vsel %vm305, %v294, %v296
        %v307 = vsel %vm305, %v296, %v298
        %v308 = vsel %vm305, %v300, %v302
        %v309 = vsel %vm305, %v302, %v304
        %316 = vrot.lane.b32.xlu0 %v258, 110
        %v317 = vpop.permute.xlu0 %316
        %318 = vrot.lane.b32.xlu0 %v259, 110
        %v319 = vpop.permute.xlu0 %318
        %320 = vrot.lane.b32.xlu0 %v260, 110
        %v321 = vpop.permute.xlu0 %320
        %322 = vrot.lane.b32.xlu0 %v261, 110
        %v323 = vpop.permute.xlu0 %322
        %324 = vrot.lane.b32.xlu0 %v262, 110
        %v325 = vpop.permute.xlu0 %324
        %326 = vrot.lane.b32.xlu0 %v263, 110
        %v327 = vpop.permute.xlu0 %326
        %vm328 = vcmask 900096
        %v329 = vsel %vm328, %v317, %v319
        %v330 = vsel %vm328, %v319, %v321
        %v331 = vsel %vm328, %v323, %v325
        %v332 = vsel %vm328, %v325, %v327
        %339 = vrot.lane.b32.xlu0 %v258, 109
        %v340 = vpop.permute.xlu0 %339
        %341 = vrot.lane.b32.xlu0 %v259, 109
        %v342 = vpop.permute.xlu0 %341
        %343 = vrot.lane.b32.xlu0 %v260, 109
        %v344 = vpop.permute.xlu0 %343
        %345 = vrot.lane.b32.xlu0 %v261, 109
        %v346 = vpop.permute.xlu0 %345
        %347 = vrot.lane.b32.xlu0 %v262, 109
        %v348 = vpop.permute.xlu0 %347
        %349 = vrot.lane.b32.xlu0 %v263, 109
        %v350 = vpop.permute.xlu0 %349
        %vm351 = vcmask 891904
        %v352 = vsel %vm351, %v340, %v342
        %v353 = vsel %vm351, %v342, %v344
        %v354 = vsel %vm351, %v346, %v348
        %v355 = vsel %vm351, %v348, %v350
        %362 = vrot.lane.b32.xlu0 %v258, 108
        %v363 = vpop.permute.xlu0 %362
        %364 = vrot.lane.b32.xlu0 %v259, 108
        %v365 = vpop.permute.xlu0 %364
        %366 = vrot.lane.b32.xlu0 %v260, 108
        %v367 = vpop.permute.xlu0 %366
        %368 = vrot.lane.b32.xlu0 %v261, 108
        %v369 = vpop.permute.xlu0 %368
        %370 = vrot.lane.b32.xlu0 %v262, 108
        %v371 = vpop.permute.xlu0 %370
        %372 = vrot.lane.b32.xlu0 %v263, 108
        %v373 = vpop.permute.xlu0 %372
        %vm374 = vcmask 883712
        %v375 = vsel %vm374, %v363, %v365
        %v376 = vsel %vm374, %v365, %v367
        %v377 = vsel %vm374, %v369, %v371
        %v378 = vsel %vm374, %v371, %v373
        %385 = vrot.lane.b32.xlu0 %v258, 92
        %v386 = vpop.permute.xlu0 %385
        %387 = vrot.lane.b32.xlu0 %v259, 92
        %v388 = vpop.permute.xlu0 %387
        %389 = vrot.lane.b32.xlu0 %v260, 92
        %v390 = vpop.permute.xlu0 %389
        %391 = vrot.lane.b32.xlu0 %v261, 92
        %v392 = vpop.permute.xlu0 %391
        %393 = vrot.lane.b32.xlu0 %v262, 92
        %v394 = vpop.permute.xlu0 %393
        %395 = vrot.lane.b32.xlu0 %v263, 92
        %v396 = vpop.permute.xlu0 %395
        %vm397 = vcmask 752640
        %v398 = vsel %vm397, %v386, %v388
        %v399 = vsel %vm397, %v388, %v390
        %v400 = vsel %vm397, %v392, %v394
        %v401 = vsel %vm397, %v394, %v396
        %408 = vrot.lane.b32.xlu0 %v258, 91
        %v409 = vpop.permute.xlu0 %408
        %410 = vrot.lane.b32.xlu0 %v259, 91
        %v411 = vpop.permute.xlu0 %410
        %412 = vrot.lane.b32.xlu0 %v260, 91
        %v413 = vpop.permute.xlu0 %412
        %414 = vrot.lane.b32.xlu0 %v261, 91
        %v415 = vpop.permute.xlu0 %414
        %416 = vrot.lane.b32.xlu0 %v262, 91
        %v417 = vpop.permute.xlu0 %416
        %418 = vrot.lane.b32.xlu0 %v263, 91
        %v419 = vpop.permute.xlu0 %418
        %vm420 = vcmask 744448
        %v421 = vsel %vm420, %v409, %v411
        %v422 = vsel %vm420, %v411, %v413
        %v423 = vsel %vm420, %v415, %v417
        %v424 = vsel %vm420, %v417, %v419
        %431 = vrot.lane.b32.xlu0 %v258, 90
        %v432 = vpop.permute.xlu0 %431
        %433 = vrot.lane.b32.xlu0 %v259, 90
        %v434 = vpop.permute.xlu0 %433
        %435 = vrot.lane.b32.xlu0 %v260, 90
        %v436 = vpop.permute.xlu0 %435
        %437 = vrot.lane.b32.xlu0 %v261, 90
        %v438 = vpop.permute.xlu0 %437
        %439 = vrot.lane.b32.xlu0 %v262, 90
        %v440 = vpop.permute.xlu0 %439
        %441 = vrot.lane.b32.xlu0 %v263, 90
        %v442 = vpop.permute.xlu0 %441
        %vm443 = vcmask 736256
        %v444 = vsel %vm443, %v432, %v434
        %v445 = vsel %vm443, %v434, %v436
        %v446 = vsel %vm443, %v438, %v440
        %v447 = vsel %vm443, %v440, %v442
        %v454 = vld [vmem:[#allocation6] sm:$0xff]
        %v455 = vld [vmem:[#allocation6 + $0x8] sm:$0xff]
        %v456 = vld [vmem:[#allocation6 + $0x10] sm:$0xff]
        %v457 = vld [vmem:[#allocation6 + $0x18] sm:$0xff]
        %v458 = vld [vmem:[#allocation6 + $0x20] sm:$0xff]
        %v459 = vld [vmem:[#allocation6 + $0x28] sm:$0xff]
        %v460 = vld [vmem:[#allocation6 + $0x30] sm:$0xff]
        %v461 = vld [vmem:[#allocation6 + $0x38] sm:$0xff]
        %v462 = vld [vmem:[%s2] sm:$0xff]
        %v463 = vld [vmem:[%s2 + $0x8] sm:$0xff]
        %v464 = vld [vmem:[%s2 + $0x10] sm:$0xff]
        %v465 = vld [vmem:[%s2 + $0x18] sm:$0xff]
        %467 = vset.pattern.permute.xlu0 0
        %468 = vperm.xlu0 %467, %v462
        %v469 = vpop.permute.xlu0 %468
        %472 = vset.pattern.permute.xlu0 0
        %473 = vperm.xlu0 %472, %v463
        %v474 = vpop.permute.xlu0 %473
        %477 = vset.pattern.permute.xlu0 0
        %478 = vperm.xlu0 %477, %v464
        %v479 = vpop.permute.xlu0 %478
        %482 = vset.pattern.permute.xlu0 0
        %483 = vperm.xlu0 %482, %v465
        %v484 = vpop.permute.xlu0 %483
        %vm486 = vcmask 130048
        %v488 = vsel %vm486, %v455, 0
        %v491 = vsel %vm486, %v457, 0
        %v494 = vsel %vm486, %v459, 0
        %v497 = vsel %vm486, %v461, 0
        %499 = vmatprep.subr.mxu0 %v259
        %500 = vmatpush1.msra.mxu0 %v258
        %501 = vmatprep.subr.mxu0 %v262
        %502 = vmatpush1.msra.mxu0 %v261
        %503 = vmatprep.subr.mxu0 %v284
        %504 = vmatpush1.msra.mxu0 %v283
        %505 = vmatprep.subr.mxu0 %v286
        %506 = vmatpush1.msra.mxu0 %v285
        %507 = vmatprep.subr.mxu0 %v307
        %508 = vmatpush1.msra.mxu0 %v306
        %509 = vmatprep.subr.mxu0 %v309
        %510 = vmatpush1.msra.mxu0 %v308
        %511 = vmatprep.subr.mxu0 %v330
        %512 = vmatpush1.msra.mxu0 %v329
        %513 = vmatprep.subr.mxu0 %v332
        %514 = vmatpush1.msra.mxu0 %v331
        %515 = vmatprep.subr.mxu0 %v353
        %516 = vmatpush1.msra.mxu0 %v352
        %517 = vmatprep.subr.mxu0 %v355
        %518 = vmatpush1.msra.mxu0 %v354
        %519 = vmatprep.subr.mxu0 %v376
        %520 = vmatpush1.msra.mxu0 %v375
        %521 = vmatprep.subr.mxu0 %v378
        %522 = vmatpush1.msra.mxu0 %v377
        %523 = vmatprep.subr.mxu0 %v399
        %524 = vmatpush1.msra.mxu0 %v398
        %525 = vmatprep.subr.mxu0 %v401
        %526 = vmatpush1.msra.mxu0 %v400
        %527 = vmatprep.subr.mxu0 %v422
        %528 = vmatpush1.msra.mxu0 %v421
        %529 = vmatprep.subr.mxu0 %v424
        %530 = vmatpush1.msra.mxu0 %v423
        %531 = vmatprep.subr.mxu0 %v445
        %532 = vmatpush1.msra.mxu0 %v444
        %533 = vmatprep.subr.mxu0 %v447
        %534 = vmatpush1.msra.mxu0 %v446
        %535 = vmatprep.subr.mxu0 0.0
        %536 = vmatpush1.msra.mxu0 0.0
        %537 = vmatprep.subr.mxu0 0.0
        %538 = vmatpush1.msra.mxu0 0.0
        %539 = vmatprep.subr.mxu0 0.0
        %540 = vmatpush1.msra.mxu0 0.0
        %541 = vmatprep.subr.mxu0 0.0
        %542 = vmatpush1.msra.mxu0 0.0
        %543 = vmatprep.subr.mxu0 0.0
        %544 = vmatpush1.msra.mxu0 0.0
        %545 = vmatprep.subr.mxu0 0.0
        %546 = vmatpush1.msra.mxu0 0.0
        %547 = vmatprep.subr.mxu0 0.0
        %548 = vmatpush1.msra.mxu0 0.0
        %549 = vmatprep.subr.mxu0 0.0
        %550 = vmatpush1.msra.mxu0 0.0
        %551 = vmatprep.subr.mxu0 0.0
        %552 = vmatpush1.msra.mxu0 0.0
        %553 = vmatprep.subr.mxu0 0.0
        %554 = vmatpush1.msra.mxu0 0.0
        %555 = vmatprep.subr.mxu0 0.0
        %556 = vmatpush1.msra.mxu0 0.0
        %557 = vmatprep.subr.mxu0 0.0
        %558 = vmatpush1.msra.mxu0 0.0
        %559 = vmatprep.subr.mxu0 0.0
        %560 = vmatpush1.msra.mxu0 0.0
        %561 = vmatprep.subr.mxu0 0.0
        %562 = vmatpush1.msra.mxu0 0.0
        %563 = vmatprep.mubr.f32.mxu0 %v488
        %564 = vmatmul.mubr.f32.gmra.mrb[0].mxu0 %v454
        %v565 = vpop.f32.mrb[0].mxu0
        %v566 = vadd.f32 %v469, %v565
        %v567 = vpop.f32.mrb[0].mxu0
        %v568 = vadd.f32 %v469, %v567
        %569 = vmatprep.mubr.f32.mxu0 %v491
        %570 = vmatmul.mubr.f32.gmra.mrb[0].mxu0 %v456
        %v571 = vpop.f32.mrb[0].mxu0
        %v572 = vadd.f32 %v474, %v571
        %v573 = vpop.f32.mrb[0].mxu0
        %v574 = vadd.f32 %v474, %v573
        %575 = vmatprep.mubr.f32.mxu0 %v494
        %576 = vmatmul.mubr.f32.gmra.mrb[0].mxu0 %v458
        %v577 = vpop.f32.mrb[0].mxu0
        %v578 = vadd.f32 %v479, %v577
        %v579 = vpop.f32.mrb[0].mxu0
        %v580 = vadd.f32 %v479, %v579
        %581 = vmatprep.mubr.f32.mxu0 %v497
        %582 = vmatmul.mubr.f32.gmra.mrb[0].mxu0 %v460
        %v583 = vpop.f32.mrb[0].mxu0
        %v584 = vadd.f32 %v484, %v583
        %v585 = vpop.f32.mrb[0].mxu0
        %v586 = vadd.f32 %v484, %v585
        %587 = vdwg.mxu0
        %588 = vmatprep.subr.mxu0 0.0
        %589 = vmatpush1.msra.mxu0 %v260
        %590 = vmatprep.subr.mxu0 0.0
        %591 = vmatpush1.msra.mxu0 %v263
        %592 = vmatprep.subr.mxu0 0.0
        %593 = vmatpush1.msra.mxu0 %v275
        %594 = vmatprep.subr.mxu0 0.0
        %595 = vmatpush1.msra.mxu0 %v281
        %596 = vmatprep.subr.mxu0 0.0
        %597 = vmatpush1.msra.mxu0 %v298
        %598 = vmatprep.subr.mxu0 0.0
        %599 = vmatpush1.msra.mxu0 %v304
        %600 = vmatprep.subr.mxu0 0.0
        %601 = vmatpush1.msra.mxu0 %v321
        %602 = vmatprep.subr.mxu0 0.0
        %603 = vmatpush1.msra.mxu0 %v327
        %604 = vmatprep.subr.mxu0 0.0
        %605 = vmatpush1.msra.mxu0 %v344
        %606 = vmatprep.subr.mxu0 0.0
        %607 = vmatpush1.msra.mxu0 %v350
        %608 = vmatprep.subr.mxu0 0.0
        %609 = vmatpush1.msra.mxu0 %v367
        %610 = vmatprep.subr.mxu0 0.0
        %611 = vmatpush1.msra.mxu0 %v373
        %612 = vmatprep.subr.mxu0 0.0
        %613 = vmatpush1.msra.mxu0 %v390
        %614 = vmatprep.subr.mxu0 0.0
        %615 = vmatpush1.msra.mxu0 %v396
        %616 = vmatprep.subr.mxu0 0.0
        %617 = vmatpush1.msra.mxu0 %v413
        %618 = vmatprep.subr.mxu0 0.0
        %619 = vmatpush1.msra.mxu0 %v419
        %620 = vmatprep.subr.mxu0 0.0
        %621 = vmatpush1.msra.mxu0 %v436
        %622 = vmatprep.subr.mxu0 0.0
        %623 = vmatpush1.msra.mxu0 %v442
        %624 = vmatprep.subr.mxu0 0.0
        %625 = vmatpush1.msra.mxu0 0.0
        %626 = vmatprep.subr.mxu0 0.0
        %627 = vmatpush1.msra.mxu0 0.0
        %628 = vmatprep.subr.mxu0 0.0
        %629 = vmatpush1.msra.mxu0 0.0
        %630 = vmatprep.subr.mxu0 0.0
        %631 = vmatpush1.msra.mxu0 0.0
        %632 = vmatprep.subr.mxu0 0.0
        %633 = vmatpush1.msra.mxu0 0.0
        %634 = vmatprep.subr.mxu0 0.0
        %635 = vmatpush1.msra.mxu0 0.0
        %636 = vmatprep.subr.mxu0 0.0
        %637 = vmatpush1.msra.mxu0 0.0
        %638 = vmatprep.subr.mxu0 0.0
        %639 = vmatpush1.msra.mxu0 0.0
        %640 = vmatprep.subr.mxu0 0.0
        %641 = vmatpush1.msra.mxu0 0.0
        %642 = vmatprep.subr.mxu0 0.0
        %643 = vmatpush1.msra.mxu0 0.0
        %644 = vmatprep.subr.mxu0 0.0
        %645 = vmatpush1.msra.mxu0 0.0
        %646 = vmatprep.subr.mxu0 0.0
        %647 = vmatpush1.msra.mxu0 0.0
        %648 = vmatprep.subr.mxu0 0.0
        %649 = vmatpush1.msra.mxu0 0.0
        %650 = vmatprep.subr.mxu0 0.0
        %651 = vmatpush1.msra.mxu0 0.0
        %652 = vmatprep.mubr.f32.mxu0 %v488
        %653 = vmatmul.mubr.f32.gmra.mrb[0].mxu0 %v454
        %v654 = vpop.f32.mrb[0].mxu0
        %v655 = vadd.f32 %v469, %v654
        %v656 = vpop.f32.mrb[0].mxu0
        %657 = vmatprep.mubr.f32.mxu0 %v491
        %658 = vmatmul.mubr.f32.gmra.mrb[0].mxu0 %v456
        %v659 = vpop.f32.mrb[0].mxu0
        %v660 = vadd.f32 %v474, %v659
        %v661 = vpop.f32.mrb[0].mxu0
        %662 = vmatprep.mubr.f32.mxu0 %v494
        %663 = vmatmul.mubr.f32.gmra.mrb[0].mxu0 %v458
        %v664 = vpop.f32.mrb[0].mxu0
        %v665 = vadd.f32 %v479, %v664
        %v666 = vpop.f32.mrb[0].mxu0
        %667 = vmatprep.mubr.f32.mxu0 %v497
        %668 = vmatmul.mubr.f32.gmra.mrb[0].mxu0 %v460
        %v669 = vpop.f32.mrb[0].mxu0
        %v670 = vadd.f32 %v484, %v669
        %v671 = vpop.f32.mrb[0].mxu0
        %672 = vdwg.mxu0
        %v673 = vmax.f32 %v566, 0.0
        %v674 = vmax.f32 %v568, 0.0
        %v675 = vmax.f32 %v655, 0.0
        %v676 = vmax.f32 %v572, 0.0
        %v677 = vmax.f32 %v574, 0.0
        %v678 = vmax.f32 %v660, 0.0
        %v679 = vmax.f32 %v578, 0.0
        %v680 = vmax.f32 %v580, 0.0
        %v681 = vmax.f32 %v665, 0.0
        %v682 = vmax.f32 %v584, 0.0
        %v683 = vmax.f32 %v586, 0.0
        %v684 = vmax.f32 %v670, 0.0
        %v685 = vlaneseq
        %v686 = vand.u32 %v685, 127
        %v687 = vadd.s32 %v686, 128
        %v688 = vadd.s32 %v686, 256
        %vm689 = vcmp.lt.s32.totalorder %v686, 0
        %v690 = vsub.s32 0, %v686
        %v691 = vsel %vm689, %v690, %v686
        %v692 = vmul.u32.u64.compose %v691, 3817748708
        %v693 = vextract.low.u32 %v692
        %v694 = vextract.high.u32 %v692
        %v695 = vshrl.u32 %v694, 4
        %v696 = vmul.u32 %v695, 18
        %v697 = vsub.s32 %v691, %v696
        %v698 = vsub.s32 0, %v697
        %v699 = vsel %vm689, %v698, %v697
        %vm700 = vcmp.lt.s32.totalorder %v687, 0
        %v701 = vsub.s32 0, %v687
        %v702 = vsel %vm700, %v701, %v687
        %v703 = vmul.u32.u64.compose %v702, 3817748708
        %v704 = vextract.low.u32 %v703
        %v705 = vextract.high.u32 %v703
        %v706 = vshrl.u32 %v705, 4
        %v707 = vmul.u32 %v706, 18
        %v708 = vsub.s32 %v702, %v707
        %v709 = vsub.s32 0, %v708
        %v710 = vsel %vm700, %v709, %v708
        %vm711 = vcmp.lt.s32.totalorder %v688, 0
        %v712 = vsub.s32 0, %v688
        %v713 = vsel %vm711, %v712, %v688
        %v714 = vmul.u32.u64.compose %v713, 3817748708
        %v715 = vextract.low.u32 %v714
        %v716 = vextract.high.u32 %v714
        %v717 = vshrl.u32 %v716, 4
        %v718 = vmul.u32 %v717, 18
        %v719 = vsub.s32 %v713, %v718
        %v720 = vsub.s32 0, %v719
        %v721 = vsel %vm711, %v720, %v719
        %vm722 = vcmp.ne.s32.totalorder %v699, 0
        %vm723 = vcmp.ne.s32.totalorder %v710, 0
        %vm724 = vcmp.ne.s32.totalorder %v721, 0
        %vm725 = vcmp.lt.s32.totalorder %v699, 0
        %vm726 = vcmp.lt.s32.totalorder %v710, 0
        %vm727 = vcmp.lt.s32.totalorder %v721, 0
        %vm728 = vmand %vm725, %vm722
        %vm729 = vmand %vm726, %vm723
        %vm730 = vmand %vm727, %vm724
        %v731 = vadd.s32 %v699, 18
        %v732 = vadd.s32 %v710, 18
        %v733 = vadd.s32 %v721, 18
        %v734 = vsel %vm728, %v731, %v699
        %v735 = vsel %vm729, %v732, %v710
        %v736 = vsel %vm730, %v733, %v721
        %vm737 = vcmp.lt.s32.totalorder %v734, 16
        %vm738 = vcmp.lt.s32.totalorder %v735, 16
        %vm739 = vcmp.lt.s32.totalorder %v736, 16
        %v740 = vsel %vm737, 1, 0
        %v741 = vsel %vm738, 1, 0
        %v742 = vsel %vm739, 1, 0
        %vm743 = vcmp.eq.s32.totalorder %v740, 1
        %vm744 = vcmp.eq.s32.totalorder %v741, 1
        %vm745 = vcmp.eq.s32.totalorder %v742, 1
        %v746 = vsel %vm743, %v673, 0.0
        %v747 = vsel %vm744, %v674, 0.0
        %v748 = vsel %vm745, %v675, 0.0
        %v749 = vsel %vm743, %v676, 0.0
        %v750 = vsel %vm744, %v677, 0.0
        %v751 = vsel %vm745, %v678, 0.0
        %v752 = vsel %vm743, %v679, 0.0
        %v753 = vsel %vm744, %v680, 0.0
        %v754 = vsel %vm745, %v681, 0.0
        %v755 = vsel %vm743, %v682, 0.0
        %v756 = vsel %vm744, %v683, 0.0
        %v757 = vsel %vm745, %v684, 0.0
        %vm758 = vcmask 154624
        %759 = vst.msk [vmem:[#allocation2] sm:$0xff] %vm758, 0.0
        %760 = vst.msk [vmem:[#allocation2 + $0x18] sm:$0xff] %vm758, 0.0
        %761 = vst.msk [vmem:[#allocation2 + $0x30] sm:$0xff] %vm758, 0.0
        %762 = vst.msk [vmem:[#allocation2 + $0x48] sm:$0xff] %vm758, 0.0
        %vm763 = vcmask 703896
        %764 = vst.msk [vmem:[#allocation2 + $0x10] sm:$0xff] %vm763, 0.0
        %765 = vst.msk [vmem:[#allocation2 + $0x28] sm:$0xff] %vm763, 0.0
        %766 = vst.msk [vmem:[#allocation2 + $0x40] sm:$0xff] %vm763, 0.0
        %767 = vst.msk [vmem:[#allocation2 + $0x58] sm:$0xff] %vm763, 0.0
        %780 = vrot.lane.b32.xlu0 %v746, 19
        %v781 = vpop.permute.xlu0 %780
        %782 = vrot.lane.b32.xlu0 %v747, 19
        %v783 = vpop.permute.xlu0 %782
        %784 = vrot.lane.b32.xlu0 %v748, 19
        %v785 = vpop.permute.xlu0 %784
        %786 = vrot.lane.b32.xlu0 %v749, 19
        %v787 = vpop.permute.xlu0 %786
        %788 = vrot.lane.b32.xlu0 %v750, 19
        %v789 = vpop.permute.xlu0 %788
        %790 = vrot.lane.b32.xlu0 %v751, 19
        %v791 = vpop.permute.xlu0 %790
        %792 = vrot.lane.b32.xlu0 %v752, 19
        %v793 = vpop.permute.xlu0 %792
        %794 = vrot.lane.b32.xlu0 %v753, 19
        %v795 = vpop.permute.xlu0 %794
        %796 = vrot.lane.b32.xlu0 %v754, 19
        %v797 = vpop.permute.xlu0 %796
        %798 = vrot.lane.b32.xlu0 %v755, 19
        %v799 = vpop.permute.xlu0 %798
        %800 = vrot.lane.b32.xlu0 %v756, 19
        %v801 = vpop.permute.xlu0 %800
        %802 = vrot.lane.b32.xlu0 %v757, 19
        %v803 = vpop.permute.xlu0 %802
        %v804 = vsel %vm758, %v781, %v783
        %v805 = vsel %vm758, %v783, %v785
        %v806 = vsel %vm758, %v787, %v789
        %v807 = vsel %vm758, %v789, %v791
        %v808 = vsel %vm758, %v793, %v795
        %v809 = vsel %vm758, %v795, %v797
        %v810 = vsel %vm758, %v799, %v801
        %v811 = vsel %vm758, %v801, %v803
        %vm824 = vcmask 1047704
        %825 = vst.msk [vmem:[#allocation2] sm:$0xff] %vm824, %v781
        %826 = vst [vmem:[#allocation2 + $0x8] sm:$0xff] %v804
        %vm827 = vcmask 416768
        %828 = vst.msk [vmem:[#allocation2 + $0x10] sm:$0xff] %vm827, %v805
        %829 = vst.msk [vmem:[#allocation2 + $0x18] sm:$0xff] %vm824, %v787
        %830 = vst [vmem:[#allocation2 + $0x20] sm:$0xff] %v806
        %831 = vst.msk [vmem:[#allocation2 + $0x28] sm:$0xff] %vm827, %v807
        %832 = vst.msk [vmem:[#allocation2 + $0x30] sm:$0xff] %vm824, %v793
        %833 = vst [vmem:[#allocation2 + $0x38] sm:$0xff] %v808
        %834 = vst.msk [vmem:[#allocation2 + $0x40] sm:$0xff] %vm827, %v809
        %835 = vst.msk [vmem:[#allocation2 + $0x48] sm:$0xff] %vm824, %v799
        %836 = vst [vmem:[#allocation2 + $0x50] sm:$0xff] %v810
        %837 = vst.msk [vmem:[#allocation2 + $0x58] sm:$0xff] %vm827, %v811
        %v838 = vld [vmem:[#allocation2] sm:$0xff]
        %v839 = vld [vmem:[#allocation2 + $0x8] sm:$0xff]
        %v840 = vld [vmem:[#allocation2 + $0x10] sm:$0xff]
        %v841 = vld [vmem:[#allocation2 + $0x18] sm:$0xff]
        %v842 = vld [vmem:[#allocation2 + $0x20] sm:$0xff]
        %v843 = vld [vmem:[#allocation2 + $0x28] sm:$0xff]
        %v844 = vld [vmem:[#allocation2 + $0x30] sm:$0xff]
        %v845 = vld [vmem:[#allocation2 + $0x38] sm:$0xff]
        %v846 = vld [vmem:[#allocation2 + $0x40] sm:$0xff]
        %v847 = vld [vmem:[#allocation2 + $0x48] sm:$0xff]
        %v848 = vld [vmem:[#allocation2 + $0x50] sm:$0xff]
        %v849 = vld [vmem:[#allocation2 + $0x58] sm:$0xff]
        %862 = vrot.lane.b32.xlu0 %v838, 127
        %v863 = vpop.permute.xlu0 %862
        %864 = vrot.lane.b32.xlu0 %v839, 127
        %v865 = vpop.permute.xlu0 %864
        %866 = vrot.lane.b32.xlu0 %v840, 127
        %v867 = vpop.permute.xlu0 %866
        %868 = vrot.lane.b32.xlu0 %v841, 127
        %v869 = vpop.permute.xlu0 %868
        %870 = vrot.lane.b32.xlu0 %v842, 127
        %v871 = vpop.permute.xlu0 %870
        %872 = vrot.lane.b32.xlu0 %v843, 127
        %v873 = vpop.permute.xlu0 %872
        %874 = vrot.lane.b32.xlu0 %v844, 127
        %v875 = vpop.permute.xlu0 %874
        %876 = vrot.lane.b32.xlu0 %v845, 127
        %v877 = vpop.permute.xlu0 %876
        %878 = vrot.lane.b32.xlu0 %v846, 127
        %v879 = vpop.permute.xlu0 %878
        %880 = vrot.lane.b32.xlu0 %v847, 127
        %v881 = vpop.permute.xlu0 %880
        %882 = vrot.lane.b32.xlu0 %v848, 127
        %v883 = vpop.permute.xlu0 %882
        %884 = vrot.lane.b32.xlu0 %v849, 127
        %v885 = vpop.permute.xlu0 %884
        %v886 = vsel %vm282, %v863, %v865
        %v887 = vsel %vm282, %v865, %v867
        %v888 = vsel %vm282, %v869, %v871
        %v889 = vsel %vm282, %v871, %v873
        %v890 = vsel %vm282, %v875, %v877
        %v891 = vsel %vm282, %v877, %v879
        %v892 = vsel %vm282, %v881, %v883
        %v893 = vsel %vm282, %v883, %v885
        %906 = vrot.lane.b32.xlu0 %v838, 126
        %v907 = vpop.permute.xlu0 %906
        %908 = vrot.lane.b32.xlu0 %v839, 126
        %v909 = vpop.permute.xlu0 %908
        %910 = vrot.lane.b32.xlu0 %v840, 126
        %v911 = vpop.permute.xlu0 %910
        %912 = vrot.lane.b32.xlu0 %v841, 126
        %v913 = vpop.permute.xlu0 %912
        %914 = vrot.lane.b32.xlu0 %v842, 126
        %v915 = vpop.permute.xlu0 %914
        %916 = vrot.lane.b32.xlu0 %v843, 126
        %v917 = vpop.permute.xlu0 %916
        %918 = vrot.lane.b32.xlu0 %v844, 126
        %v919 = vpop.permute.xlu0 %918
        %920 = vrot.lane.b32.xlu0 %v845, 126
        %v921 = vpop.permute.xlu0 %920
        %922 = vrot.lane.b32.xlu0 %v846, 126
        %v923 = vpop.permute.xlu0 %922
        %924 = vrot.lane.b32.xlu0 %v847, 126
        %v925 = vpop.permute.xlu0 %924
        %926 = vrot.lane.b32.xlu0 %v848, 126
        %v927 = vpop.permute.xlu0 %926
        %928 = vrot.lane.b32.xlu0 %v849, 126
        %v929 = vpop.permute.xlu0 %928
        %v930 = vsel %vm305, %v907, %v909
        %v931 = vsel %vm305, %v909, %v911
        %v932 = vsel %vm305, %v913, %v915
        %v933 = vsel %vm305, %v915, %v917
        %v934 = vsel %vm305, %v919, %v921
        %v935 = vsel %vm305, %v921, %v923
        %v936 = vsel %vm305, %v925, %v927
        %v937 = vsel %vm305, %v927, %v929
        %950 = vrot.lane.b32.xlu0 %v838, 110
        %v951 = vpop.permute.xlu0 %950
        %952 = vrot.lane.b32.xlu0 %v839, 110
        %v953 = vpop.permute.xlu0 %952
        %954 = vrot.lane.b32.xlu0 %v840, 110
        %v955 = vpop.permute.xlu0 %954
        %956 = vrot.lane.b32.xlu0 %v841, 110
        %v957 = vpop.permute.xlu0 %956
        %958 = vrot.lane.b32.xlu0 %v842, 110
        %v959 = vpop.permute.xlu0 %958
        %960 = vrot.lane.b32.xlu0 %v843, 110
        %v961 = vpop.permute.xlu0 %960
        %962 = vrot.lane.b32.xlu0 %v844, 110
        %v963 = vpop.permute.xlu0 %962
        %964 = vrot.lane.b32.xlu0 %v845, 110
        %v965 = vpop.permute.xlu0 %964
        %966 = vrot.lane.b32.xlu0 %v846, 110
        %v967 = vpop.permute.xlu0 %966
        %968 = vrot.lane.b32.xlu0 %v847, 110
        %v969 = vpop.permute.xlu0 %968
        %970 = vrot.lane.b32.xlu0 %v848, 110
        %v971 = vpop.permute.xlu0 %970
        %972 = vrot.lane.b32.xlu0 %v849, 110
        %v973 = vpop.permute.xlu0 %972
        %v974 = vsel %vm328, %v951, %v953
        %v975 = vsel %vm328, %v953, %v955
        %v976 = vsel %vm328, %v957, %v959
        %v977 = vsel %vm328, %v959, %v961
        %v978 = vsel %vm328, %v963, %v965
        %v979 = vsel %vm328, %v965, %v967
        %v980 = vsel %vm328, %v969, %v971
        %v981 = vsel %vm328, %v971, %v973
        %994 = vrot.lane.b32.xlu0 %v838, 109
        %v995 = vpop.permute.xlu0 %994
        %996 = vrot.lane.b32.xlu0 %v839, 109
        %v997 = vpop.permute.xlu0 %996
        %998 = vrot.lane.b32.xlu0 %v840, 109
        %v999 = vpop.permute.xlu0 %998
        %1000 = vrot.lane.b32.xlu0 %v841, 109
        %v1001 = vpop.permute.xlu0 %1000
        %1002 = vrot.lane.b32.xlu0 %v842, 109
        %v1003 = vpop.permute.xlu0 %1002
        %1004 = vrot.lane.b32.xlu0 %v843, 109
        %v1005 = vpop.permute.xlu0 %1004
        %1006 = vrot.lane.b32.xlu0 %v844, 109
        %v1007 = vpop.permute.xlu0 %1006
        %1008 = vrot.lane.b32.xlu0 %v845, 109
        %v1009 = vpop.permute.xlu0 %1008
        %1010 = vrot.lane.b32.xlu0 %v846, 109
        %v1011 = vpop.permute.xlu0 %1010
        %1012 = vrot.lane.b32.xlu0 %v847, 109
        %v1013 = vpop.permute.xlu0 %1012
        %1014 = vrot.lane.b32.xlu0 %v848, 109
        %v1015 = vpop.permute.xlu0 %1014
        %1016 = vrot.lane.b32.xlu0 %v849, 109
        %v1017 = vpop.permute.xlu0 %1016
        %v1018 = vsel %vm351, %v995, %v997
        %v1019 = vsel %vm351, %v997, %v999
        %v1020 = vsel %vm351, %v1001, %v1003
        %v1021 = vsel %vm351, %v1003, %v1005
        %v1022 = vsel %vm351, %v1007, %v1009
        %v1023 = vsel %vm351, %v1009, %v1011
        %v1024 = vsel %vm351, %v1013, %v1015
        %v1025 = vsel %vm351, %v1015, %v1017
        %1038 = vrot.lane.b32.xlu0 %v838, 108
        %v1039 = vpop.permute.xlu0 %1038
        %1040 = vrot.lane.b32.xlu0 %v839, 108
        %v1041 = vpop.permute.xlu0 %1040
        %1042 = vrot.lane.b32.xlu0 %v840, 108
        %v1043 = vpop.permute.xlu0 %1042
        %1044 = vrot.lane.b32.xlu0 %v841, 108
        %v1045 = vpop.permute.xlu0 %1044
        %1046 = vrot.lane.b32.xlu0 %v842, 108
        %v1047 = vpop.permute.xlu0 %1046
        %1048 = vrot.lane.b32.xlu0 %v843, 108
        %v1049 = vpop.permute.xlu0 %1048
        %1050 = vrot.lane.b32.xlu0 %v844, 108
        %v1051 = vpop.permute.xlu0 %1050
        %1052 = vrot.lane.b32.xlu0 %v845, 108
        %v1053 = vpop.permute.xlu0 %1052
        %1054 = vrot.lane.b32.xlu0 %v846, 108
        %v1055 = vpop.permute.xlu0 %1054
        %1056 = vrot.lane.b32.xlu0 %v847, 108
        %v1057 = vpop.permute.xlu0 %1056
        %1058 = vrot.lane.b32.xlu0 %v848, 108
        %v1059 = vpop.permute.xlu0 %1058
        %1060 = vrot.lane.b32.xlu0 %v849, 108
        %v1061 = vpop.permute.xlu0 %1060
        %v1062 = vsel %vm374, %v1039, %v1041
        %v1063 = vsel %vm374, %v1041, %v1043
        %v1064 = vsel %vm374, %v1045, %v1047
        %v1065 = vsel %vm374, %v1047, %v1049
        %v1066 = vsel %vm374, %v1051, %v1053
        %v1067 = vsel %vm374, %v1053, %v1055
        %v1068 = vsel %vm374, %v1057, %v1059
        %v1069 = vsel %vm374, %v1059, %v1061
        %1082 = vrot.lane.b32.xlu0 %v838, 92
        %v1083 = vpop.permute.xlu0 %1082
        %1084 = vrot.lane.b32.xlu0 %v839, 92
        %v1085 = vpop.permute.xlu0 %1084
        %1086 = vrot.lane.b32.xlu0 %v840, 92
        %v1087 = vpop.permute.xlu0 %1086
        %1088 = vrot.lane.b32.xlu0 %v841, 92
        %v1089 = vpop.permute.xlu0 %1088
        %1090 = vrot.lane.b32.xlu0 %v842, 92
        %v1091 = vpop.permute.xlu0 %1090
        %1092 = vrot.lane.b32.xlu0 %v843, 92
        %v1093 = vpop.permute.xlu0 %1092
        %1094 = vrot.lane.b32.xlu0 %v844, 92
        %v1095 = vpop.permute.xlu0 %1094
        %1096 = vrot.lane.b32.xlu0 %v845, 92
        %v1097 = vpop.permute.xlu0 %1096
        %1098 = vrot.lane.b32.xlu0 %v846, 92
        %v1099 = vpop.permute.xlu0 %1098
        %1100 = vrot.lane.b32.xlu0 %v847, 92
        %v1101 = vpop.permute.xlu0 %1100
        %1102 = vrot.lane.b32.xlu0 %v848, 92
        %v1103 = vpop.permute.xlu0 %1102
        %1104 = vrot.lane.b32.xlu0 %v849, 92
        %v1105 = vpop.permute.xlu0 %1104
        %v1106 = vsel %vm397, %v1083, %v1085
        %v1107 = vsel %vm397, %v1085, %v1087
        %v1108 = vsel %vm397, %v1089, %v1091
        %v1109 = vsel %vm397, %v1091, %v1093
        %v1110 = vsel %vm397, %v1095, %v1097
        %v1111 = vsel %vm397, %v1097, %v1099
        %v1112 = vsel %vm397, %v1101, %v1103
        %v1113 = vsel %vm397, %v1103, %v1105
        %1126 = vrot.lane.b32.xlu0 %v838, 91
        %v1127 = vpop.permute.xlu0 %1126
        %1128 = vrot.lane.b32.xlu0 %v839, 91
        %v1129 = vpop.permute.xlu0 %1128
        %1130 = vrot.lane.b32.xlu0 %v840, 91
        %v1131 = vpop.permute.xlu0 %1130
        %1132 = vrot.lane.b32.xlu0 %v841, 91
        %v1133 = vpop.permute.xlu0 %1132
        %1134 = vrot.lane.b32.xlu0 %v842, 91
        %v1135 = vpop.permute.xlu0 %1134
        %1136 = vrot.lane.b32.xlu0 %v843, 91
        %v1137 = vpop.permute.xlu0 %1136
        %1138 = vrot.lane.b32.xlu0 %v844, 91
        %v1139 = vpop.permute.xlu0 %1138
        %1140 = vrot.lane.b32.xlu0 %v845, 91
        %v1141 = vpop.permute.xlu0 %1140
        %1142 = vrot.lane.b32.xlu0 %v846, 91
        %v1143 = vpop.permute.xlu0 %1142
        %1144 = vrot.lane.b32.xlu0 %v847, 91
        %v1145 = vpop.permute.xlu0 %1144
        %1146 = vrot.lane.b32.xlu0 %v848, 91
        %v1147 = vpop.permute.xlu0 %1146
        %1148 = vrot.lane.b32.xlu0 %v849, 91
        %v1149 = vpop.permute.xlu0 %1148
        %v1150 = vsel %vm420, %v1127, %v1129
        %v1151 = vsel %vm420, %v1129, %v1131
        %v1152 = vsel %vm420, %v1133, %v1135
        %v1153 = vsel %vm420, %v1135, %v1137
        %v1154 = vsel %vm420, %v1139, %v1141
        %v1155 = vsel %vm420, %v1141, %v1143
        %v1156 = vsel %vm420, %v1145, %v1147
        %v1157 = vsel %vm420, %v1147, %v1149
        %1170 = vrot.lane.b32.xlu0 %v838, 90
        %v1171 = vpop.permute.xlu0 %1170
        %1172 = vrot.lane.b32.xlu0 %v839, 90
        %v1173 = vpop.permute.xlu0 %1172
        %1174 = vrot.lane.b32.xlu0 %v840, 90
        %v1175 = vpop.permute.xlu0 %1174
        %1176 = vrot.lane.b32.xlu0 %v841, 90
        %v1177 = vpop.permute.xlu0 %1176
        %1178 = vrot.lane.b32.xlu0 %v842, 90
        %v1179 = vpop.permute.xlu0 %1178
        %1180 = vrot.lane.b32.xlu0 %v843, 90
        %v1181 = vpop.permute.xlu0 %1180
        %1182 = vrot.lane.b32.xlu0 %v844, 90
        %v1183 = vpop.permute.xlu0 %1182
        %1184 = vrot.lane.b32.xlu0 %v845, 90
        %v1185 = vpop.permute.xlu0 %1184
        %1186 = vrot.lane.b32.xlu0 %v846, 90
        %v1187 = vpop.permute.xlu0 %1186
        %1188 = vrot.lane.b32.xlu0 %v847, 90
        %v1189 = vpop.permute.xlu0 %1188
        %1190 = vrot.lane.b32.xlu0 %v848, 90
        %v1191 = vpop.permute.xlu0 %1190
        %1192 = vrot.lane.b32.xlu0 %v849, 90
        %v1193 = vpop.permute.xlu0 %1192
        %v1194 = vsel %vm443, %v1171, %v1173
        %v1195 = vsel %vm443, %v1173, %v1175
        %v1196 = vsel %vm443, %v1177, %v1179
        %v1197 = vsel %vm443, %v1179, %v1181
        %v1198 = vsel %vm443, %v1183, %v1185
        %v1199 = vsel %vm443, %v1185, %v1187
        %v1200 = vsel %vm443, %v1189, %v1191
        %v1201 = vsel %vm443, %v1191, %v1193
        %v1214 = vld [vmem:[%s3] sm:$0x3f]
        %v1215 = vld [vmem:[%s4] sm:$0x3]
        %1217 = vset.pattern.permute.xlu0 0
        %1218 = vperm.xlu0 %1217, %v1215
        %v1219 = vpop.permute.xlu0 %1218
        %v1222 = vcombine.high %v1214, %v1214
        %v1224 = vunpack.c.l.s4 1983009808
        %v1225 = vunpack.c.0.s8 %v1224
        %v1226 = vlaneseq
        %v1227 = vshrl.u32 %v1226, 7
        %v1228 = vsub.s32 %v1225, %v1227
        %v1229 = vrot.slane %v1214, %v1228
        %v1231 = vunpack.c.l.s4 1983009808
        %v1232 = vunpack.c.0.s8 %v1231
        %v1233 = vlaneseq
        %v1234 = vshrl.u32 %v1233, 7
        %v1235 = vsub.s32 %v1232, %v1234
        %v1236 = vrot.slane %v1222, %v1235
        %v1237 = vcombine.high %v1229, %v1229
        %vm1240 = vcmask 261120
        %v1241 = vsel %vm1240, %v1236, 0
        %1243 = vmatprep.subr.mxu0 %v839
        %1244 = vmatpush1.msra.mxu0 %v838
        %1245 = vmatprep.subr.mxu0 %v842
        %1246 = vmatpush1.msra.mxu0 %v841
        %1247 = vmatprep.subr.mxu0 %v845
        %1248 = vmatpush1.msra.mxu0 %v844
        %1249 = vmatprep.subr.mxu0 %v848
        %1250 = vmatpush1.msra.mxu0 %v847
        %1251 = vmatprep.subr.mxu0 %v887
        %1252 = vmatpush1.msra.mxu0 %v886
        %1253 = vmatprep.subr.mxu0 %v889
        %1254 = vmatpush1.msra.mxu0 %v888
        %1255 = vmatprep.subr.mxu0 %v891
        %1256 = vmatpush1.msra.mxu0 %v890
        %1257 = vmatprep.subr.mxu0 %v893
        %1258 = vmatpush1.msra.mxu0 %v892
        %1259 = vmatprep.subr.mxu0 %v931
        %1260 = vmatpush1.msra.mxu0 %v930
        %1261 = vmatprep.subr.mxu0 %v933
        %1262 = vmatpush1.msra.mxu0 %v932
        %1263 = vmatprep.subr.mxu0 %v935
        %1264 = vmatpush1.msra.mxu0 %v934
        %1265 = vmatprep.subr.mxu0 %v937
        %1266 = vmatpush1.msra.mxu0 %v936
        %1267 = vmatprep.subr.mxu0 %v975
        %1268 = vmatpush1.msra.mxu0 %v974
        %1269 = vmatprep.subr.mxu0 %v977
        %1270 = vmatpush1.msra.mxu0 %v976
        %1271 = vmatprep.subr.mxu0 %v979
        %1272 = vmatpush1.msra.mxu0 %v978
        %1273 = vmatprep.subr.mxu0 %v981
        %1274 = vmatpush1.msra.mxu0 %v980
        %1275 = vmatprep.subr.mxu0 %v1019
        %1276 = vmatpush1.msra.mxu0 %v1018
        %1277 = vmatprep.subr.mxu0 %v1021
        %1278 = vmatpush1.msra.mxu0 %v1020
        %1279 = vmatprep.subr.mxu0 %v1023
        %1280 = vmatpush1.msra.mxu0 %v1022
        %1281 = vmatprep.subr.mxu0 %v1025
        %1282 = vmatpush1.msra.mxu0 %v1024
        %1283 = vmatprep.subr.mxu0 %v1063
        %1284 = vmatpush1.msra.mxu0 %v1062
        %1285 = vmatprep.subr.mxu0 %v1065
        %1286 = vmatpush1.msra.mxu0 %v1064
        %1287 = vmatprep.subr.mxu0 %v1067
        %1288 = vmatpush1.msra.mxu0 %v1066
        %1289 = vmatprep.subr.mxu0 %v1069
        %1290 = vmatpush1.msra.mxu0 %v1068
        %1291 = vmatprep.subr.mxu0 %v1107
        %1292 = vmatpush1.msra.mxu0 %v1106
        %1293 = vmatprep.subr.mxu0 %v1109
        %1294 = vmatpush1.msra.mxu0 %v1108
        %1295 = vmatprep.subr.mxu0 %v1111
        %1296 = vmatpush1.msra.mxu0 %v1110
        %1297 = vmatprep.subr.mxu0 %v1113
        %1298 = vmatpush1.msra.mxu0 %v1112
        %1299 = vmatprep.subr.mxu0 %v1151
        %1300 = vmatpush1.msra.mxu0 %v1150
        %1301 = vmatprep.subr.mxu0 %v1153
        %1302 = vmatpush1.msra.mxu0 %v1152
        %1303 = vmatprep.subr.mxu0 %v1155
        %1304 = vmatpush1.msra.mxu0 %v1154
        %1305 = vmatprep.subr.mxu0 %v1157
        %1306 = vmatpush1.msra.mxu0 %v1156
        %1307 = vmatprep.mubr.f32.mxu0 %v1237
        %1308 = vmatmul.mubr.f32.gmra.mrb[0].mxu0 %v1229
        %v1309 = vpop.f32.mrb[0].mxu0
        %v1310 = vadd.f32 %v1219, %v1309
        %v1311 = vpop.f32.mrb[0].mxu0
        %v1312 = vadd.f32 %v1219, %v1311
        %1313 = vdwg.mxu0
        %1314 = vmatprep.subr.mxu0 %v1195
        %1315 = vmatpush1.msra.mxu0 %v1194
        %1316 = vmatprep.subr.mxu0 %v1197
        %1317 = vmatpush1.msra.mxu0 %v1196
        %1318 = vmatprep.subr.mxu0 %v1199
        %1319 = vmatpush1.msra.mxu0 %v1198
        %1320 = vmatprep.subr.mxu0 %v1201
        %1321 = vmatpush1.msra.mxu0 %v1200
        %1322 = vmatprep.subr.mxu0 0.0
        %1323 = vmatpush1.msra.mxu0 0.0
        %1324 = vmatprep.subr.mxu0 0.0
        %1325 = vmatpush1.msra.mxu0 0.0
        %1326 = vmatprep.subr.mxu0 0.0
        %1327 = vmatpush1.msra.mxu0 0.0
        %1328 = vmatprep.subr.mxu0 0.0
        %1329 = vmatpush1.msra.mxu0 0.0
        %1330 = vmatprep.subr.mxu0 0.0
        %1331 = vmatpush1.msra.mxu0 0.0
        %1332 = vmatprep.subr.mxu0 0.0
        %1333 = vmatpush1.msra.mxu0 0.0
        %1334 = vmatprep.subr.mxu0 0.0
        %1335 = vmatpush1.msra.mxu0 0.0
        %1336 = vmatprep.subr.mxu0 0.0
        %1337 = vmatpush1.msra.mxu0 0.0
        %1338 = vmatprep.subr.mxu0 0.0
        %1339 = vmatpush1.msra.mxu0 0.0
        %1340 = vmatprep.subr.mxu0 0.0
        %1341 = vmatpush1.msra.mxu0 0.0
        %1342 = vmatprep.subr.mxu0 0.0
        %1343 = vmatpush1.msra.mxu0 0.0
        %1344 = vmatprep.subr.mxu0 0.0
        %1345 = vmatpush1.msra.mxu0 0.0
        %1346 = vmatprep.subr.mxu0 0.0
        %1347 = vmatpush1.msra.mxu0 0.0
        %1348 = vmatprep.subr.mxu0 0.0
        %1349 = vmatpush1.msra.mxu0 0.0
        %1350 = vmatprep.subr.mxu0 0.0
        %1351 = vmatpush1.msra.mxu0 0.0
        %1352 = vmatprep.subr.mxu0 0.0
        %1353 = vmatpush1.msra.mxu0 0.0
        %1354 = vmatprep.subr.mxu0 0.0
        %1355 = vmatpush1.msra.mxu0 0.0
        %1356 = vmatprep.subr.mxu0 0.0
        %1357 = vmatpush1.msra.mxu0 0.0
        %1358 = vmatprep.subr.mxu0 0.0
        %1359 = vmatpush1.msra.mxu0 0.0
        %1360 = vmatprep.subr.mxu0 0.0
        %1361 = vmatpush1.msra.mxu0 0.0
        %1362 = vmatprep.subr.mxu0 0.0
        %1363 = vmatpush1.msra.mxu0 0.0
        %1364 = vmatprep.subr.mxu0 0.0
        %1365 = vmatpush1.msra.mxu0 0.0
        %1366 = vmatprep.subr.mxu0 0.0
        %1367 = vmatpush1.msra.mxu0 0.0
        %1368 = vmatprep.subr.mxu0 0.0
        %1369 = vmatpush1.msra.mxu0 0.0
        %1370 = vmatprep.subr.mxu0 0.0
        %1371 = vmatpush1.msra.mxu0 0.0
        %1372 = vmatprep.subr.mxu0 0.0
        %1373 = vmatpush1.msra.mxu0 0.0
        %1374 = vmatprep.subr.mxu0 0.0
        %1375 = vmatpush1.msra.mxu0 0.0
        %1376 = vmatprep.subr.mxu0 0.0
        %1377 = vmatpush1.msra.mxu0 0.0
        %1378 = vmatprep.mubr.f32.mxu0 0.0
        %1379 = vmatmul.mubr.f32.gmra.mrb[0].mxu0 %v1241
        %v1380 = vpop.f32.mrb[0].mxu0
        %v1381 = vadd.f32 %v1310, %v1380
        %v1382 = vpop.f32.mrb[0].mxu0
        %v1383 = vadd.f32 %v1312, %v1382
        %1384 = vdwg.mxu0
        %1385 = vmatprep.subr.mxu0 0.0
        %1386 = vmatpush1.msra.mxu0 %v840
        %1387 = vmatprep.subr.mxu0 0.0
        %1388 = vmatpush1.msra.mxu0 %v843
        %1389 = vmatprep.subr.mxu0 0.0
        %1390 = vmatpush1.msra.mxu0 %v846
        %1391 = vmatprep.subr.mxu0 0.0
        %1392 = vmatpush1.msra.mxu0 %v849
        %1393 = vmatprep.subr.mxu0 0.0
        %1394 = vmatpush1.msra.mxu0 %v867
        %1395 = vmatprep.subr.mxu0 0.0
        %1396 = vmatpush1.msra.mxu0 %v873
        %1397 = vmatprep.subr.mxu0 0.0
        %1398 = vmatpush1.msra.mxu0 %v879
        %1399 = vmatprep.subr.mxu0 0.0
        %1400 = vmatpush1.msra.mxu0 %v885
        %1401 = vmatprep.subr.mxu0 0.0
        %1402 = vmatpush1.msra.mxu0 %v911
        %1403 = vmatprep.subr.mxu0 0.0
        %1404 = vmatpush1.msra.mxu0 %v917
        %1405 = vmatprep.subr.mxu0 0.0
        %1406 = vmatpush1.msra.mxu0 %v923
        %1407 = vmatprep.subr.mxu0 0.0
        %1408 = vmatpush1.msra.mxu0 %v929
        %1409 = vmatprep.subr.mxu0 0.0
        %1410 = vmatpush1.msra.mxu0 %v955
        %1411 = vmatprep.subr.mxu0 0.0
        %1412 = vmatpush1.msra.mxu0 %v961
        %1413 = vmatprep.subr.mxu0 0.0
        %1414 = vmatpush1.msra.mxu0 %v967
        %1415 = vmatprep.subr.mxu0 0.0
        %1416 = vmatpush1.msra.mxu0 %v973
        %1417 = vmatprep.subr.mxu0 0.0
        %1418 = vmatpush1.msra.mxu0 %v999
        %1419 = vmatprep.subr.mxu0 0.0
        %1420 = vmatpush1.msra.mxu0 %v1005
        %1421 = vmatprep.subr.mxu0 0.0
        %1422 = vmatpush1.msra.mxu0 %v1011
        %1423 = vmatprep.subr.mxu0 0.0
        %1424 = vmatpush1.msra.mxu0 %v1017
        %1425 = vmatprep.subr.mxu0 0.0
        %1426 = vmatpush1.msra.mxu0 %v1043
        %1427 = vmatprep.subr.mxu0 0.0
        %1428 = vmatpush1.msra.mxu0 %v1049
        %1429 = vmatprep.subr.mxu0 0.0
        %1430 = vmatpush1.msra.mxu0 %v1055
        %1431 = vmatprep.subr.mxu0 0.0
        %1432 = vmatpush1.msra.mxu0 %v1061
        %1433 = vmatprep.subr.mxu0 0.0
        %1434 = vmatpush1.msra.mxu0 %v1087
        %1435 = vmatprep.subr.mxu0 0.0
        %1436 = vmatpush1.msra.mxu0 %v1093
        %1437 = vmatprep.subr.mxu0 0.0
        %1438 = vmatpush1.msra.mxu0 %v1099
        %1439 = vmatprep.subr.mxu0 0.0
        %1440 = vmatpush1.msra.mxu0 %v1105
        %1441 = vmatprep.subr.mxu0 0.0
        %1442 = vmatpush1.msra.mxu0 %v1131
        %1443 = vmatprep.subr.mxu0 0.0
        %1444 = vmatpush1.msra.mxu0 %v1137
        %1445 = vmatprep.subr.mxu0 0.0
        %1446 = vmatpush1.msra.mxu0 %v1143
        %1447 = vmatprep.subr.mxu0 0.0
        %1448 = vmatpush1.msra.mxu0 %v1149
        %1449 = vmatprep.mubr.f32.mxu0 %v1237
        %1450 = vmatmul.mubr.f32.gmra.mrb[0].mxu0 %v1229
        %v1451 = vpop.f32.mrb[0].mxu0
        %v1452 = vadd.f32 %v1219, %v1451
        %v1453 = vpop.f32.mrb[0].mxu0
        %1454 = vdwg.mxu0
        %1455 = vmatprep.subr.mxu0 0.0
        %1456 = vmatpush1.msra.mxu0 %v1175
        %1457 = vmatprep.subr.mxu0 0.0
        %1458 = vmatpush1.msra.mxu0 %v1181
        %1459 = vmatprep.subr.mxu0 0.0
        %1460 = vmatpush1.msra.mxu0 %v1187
        %1461 = vmatprep.subr.mxu0 0.0
        %1462 = vmatpush1.msra.mxu0 %v1193
        %1463 = vmatprep.subr.mxu0 0.0
        %1464 = vmatpush1.msra.mxu0 0.0
        %1465 = vmatprep.subr.mxu0 0.0
        %1466 = vmatpush1.msra.mxu0 0.0
        %1467 = vmatprep.subr.mxu0 0.0
        %1468 = vmatpush1.msra.mxu0 0.0
        %1469 = vmatprep.subr.mxu0 0.0
        %1470 = vmatpush1.msra.mxu0 0.0
        %1471 = vmatprep.subr.mxu0 0.0
        %1472 = vmatpush1.msra.mxu0 0.0
        %1473 = vmatprep.subr.mxu0 0.0
        %1474 = vmatpush1.msra.mxu0 0.0
        %1475 = vmatprep.subr.mxu0 0.0
        %1476 = vmatpush1.msra.mxu0 0.0
        %1477 = vmatprep.subr.mxu0 0.0
        %1478 = vmatpush1.msra.mxu0 0.0
        %1479 = vmatprep.subr.mxu0 0.0
        %1480 = vmatpush1.msra.mxu0 0.0
        %1481 = vmatprep.subr.mxu0 0.0
        %1482 = vmatpush1.msra.mxu0 0.0
        %1483 = vmatprep.subr.mxu0 0.0
        %1484 = vmatpush1.msra.mxu0 0.0
        %1485 = vmatprep.subr.mxu0 0.0
        %1486 = vmatpush1.msra.mxu0 0.0
        %1487 = vmatprep.subr.mxu0 0.0
        %1488 = vmatpush1.msra.mxu0 0.0
        %1489 = vmatprep.subr.mxu0 0.0
        %1490 = vmatpush1.msra.mxu0 0.0
        %1491 = vmatprep.subr.mxu0 0.0
        %1492 = vmatpush1.msra.mxu0 0.0
        %1493 = vmatprep.subr.mxu0 0.0
        %1494 = vmatpush1.msra.mxu0 0.0
        %1495 = vmatprep.subr.mxu0 0.0
        %1496 = vmatpush1.msra.mxu0 0.0
        %1497 = vmatprep.subr.mxu0 0.0
        %1498 = vmatpush1.msra.mxu0 0.0
        %1499 = vmatprep.subr.mxu0 0.0
        %1500 = vmatpush1.msra.mxu0 0.0
        %1501 = vmatprep.subr.mxu0 0.0
        %1502 = vmatpush1.msra.mxu0 0.0
        %1503 = vmatprep.subr.mxu0 0.0
        %1504 = vmatpush1.msra.mxu0 0.0
        %1505 = vmatprep.subr.mxu0 0.0
        %1506 = vmatpush1.msra.mxu0 0.0
        %1507 = vmatprep.subr.mxu0 0.0
        %1508 = vmatpush1.msra.mxu0 0.0
        %1509 = vmatprep.subr.mxu0 0.0
        %1510 = vmatpush1.msra.mxu0 0.0
        %1511 = vmatprep.subr.mxu0 0.0
        %1512 = vmatpush1.msra.mxu0 0.0
        %1513 = vmatprep.subr.mxu0 0.0
        %1514 = vmatpush1.msra.mxu0 0.0
        %1515 = vmatprep.subr.mxu0 0.0
        %1516 = vmatpush1.msra.mxu0 0.0
        %1517 = vmatprep.subr.mxu0 0.0
        %1518 = vmatpush1.msra.mxu0 0.0
        %1519 = vmatprep.mubr.f32.mxu0 0.0
        %1520 = vmatmul.mubr.f32.gmra.mrb[0].mxu0 %v1241
        %v1521 = vpop.f32.mrb[0].mxu0
        %v1522 = vadd.f32 %v1452, %v1521
        %v1523 = vpop.f32.mrb[0].mxu0
        %1524 = vdwg.mxu0
        %v1528 = vcombine.low %v1381, %v1383
        %v1530 = vunpack.c.l.s4 1983009808
        %v1531 = vunpack.c.0.s8 %v1530
        %v1532 = vlaneseq
        %v1533 = vshrl.u32 %v1532, 7
        %v1534 = vsub.s32 %v1531, %v1533
        %v1535 = vrot.slane %v1528, %v1534
        %v1537 = vunpack.c.l.s4 1983009808
        %v1538 = vunpack.c.0.s8 %v1537
        %v1539 = vlaneseq
        %v1540 = vshrl.u32 %v1539, 7
        %v1541 = vsub.s32 %v1538, %v1540
        %v1542 = vrot.slane %v1522, %v1541
        %v1543 = vcombine.low %v1535, %v1542
        %vm1545 = vcmask 1041408
        %vm1546 = vcmask 1043458
        %vm1547 = vmor %vm1546, %vm1545
        %vm1548 = vcmask 259076
        %vm1549 = vmor %vm1548, %vm1547
        %1550 = vst.msk [vmem:[%s257] sm:$0x3f] %vm1549, %v1543
        %s1551 = sand.u32 %s141, 1
        %s1552 = scalar_lea.sflag [#allocation5], %s1551
        %s1553 = sand.u32 %s141, 1
        %s1554 = smul.addr %s1553, 6
        %s1555 = scalar_lea.vmem [#allocation8], %s1554
        // Predicated region
        $region49: #{tpu_custom_call.1} parent=39 // pred_check
          %p1556 = pneg %p151
        $region50: #{tpu_custom_call.1} parent=39 // pred_check_branch
          %1558 = sbr.rel (%p1556) target = $region52
        $region51: #{tpu_custom_call.1} parent=39 // pred_region
          %s1560 = ssub.s32 96, 96
          %1561 = vsyncadd %s1552, %s1560
          %s1562 = smul.addr %s23, 3
          %s1563 = smul.addr %s1562, 32
          %s1564 = scalar_lea.hbm %s5, %s1563
          %s1566 = sshll.u32 %s1555, 4
          %s1567 = int_to_ptr.vmem [resolvable:$true] %s1566
          %1569 = dma.vmem_to_hbm [thread:$0]  %s1567, 96, %s1564, %s1552
        $region52: #{tpu_custom_call.1} parent=39 // pred_fallthru
          _
      $region40: #{tpu_custom_call.1} parent=5 // pred_fallthru
        _
      %p1570 = scmp.le.s32.totalorder 2, %s18
      // Predicated region
      $region53: #{tpu_custom_call.1} parent=5 // pred_check
        %p1571 = pneg %p1570
      $region54: #{tpu_custom_call.1} parent=5 // pred_check_branch
        %1573 = sbr.rel (%p1571) target = $region56
      $region55: #{tpu_custom_call.1} parent=5 // pred_region
        %s1574 = ssub.s32 %s18, 2
        // Predicated region
        $region57: #{tpu_custom_call.1} parent=55 // pred_check
          %p1575 = pneg %p157
        $region58: #{tpu_custom_call.1} parent=55 // pred_check_branch
          %1577 = sbr.rel (%p1575) target = $region60
        $region59: #{tpu_custom_call.1} parent=55 // pred_region
          %s1578 = sand.u32 %s142, 1
          %s1579 = scalar_lea.sflag [#allocation5], %s1578
          %s1580 = sand.u32 %s142, 1
          %s1581 = smul.addr %s1580, 6
          %s1582 = scalar_lea.vmem [#allocation8], %s1581
          %1583 = dma.done %s1579, 96
        $region60: #{tpu_custom_call.1} parent=55 // pred_fallthru
          _
      $region56: #{tpu_custom_call.1} parent=5 // pred_fallthru
        _
    $region6: #{tpu_custom_call.1} parent=1 // loop_footer
      %s22 = sadd.s32 1, %s18
    $region7: #{tpu_custom_call.1} parent=1 // loop_footer_branch
      %17 = sbr.rel target = $region3
    $region8: #{tpu_custom_call.1} parent=1 // loop_exit
      _
    %1584 = vsyncpa [#allocation4], 1
    %s1585 = scalar_lea.sflag [#allocation4], 1
    %1586 = vsyncpa %s1585, 1
    %1587 = vsyncpa [#allocation7], 1
    %1588 = vsyncpa [#allocation5], 1
    %s1589 = scalar_lea.sflag [#allocation5], 1
    %1590 = vsyncpa %s1589, 1

</llo_original>
